<compile_context>
chip_gen: v6e
topology: v6e:2x2x1
jax: 0.10.0
libtpu: 0.0.40
codegen_flags: <defaults>
</compile_context>

<pallas_src>
import jax
import jax.numpy as jnp
from jax.experimental import pallas as pl
from jax.experimental.pallas import tpu as pltpu


def gru_recurrence_kernel(gi_ref, w_hh_ref, b_hn_ref, out_ref, hid_ref):
    """Serial GRU recurrence over one batch chunk (time-major layout).

    gi_ref : (T, B, 3H)  precomputed x @ W_ih^T + b_ih (+ b_hh folded into r/z cols)
    w_hh_ref: (H, 3H)    W_hh^T
    b_hn_ref: (1, H)     hidden bias of the n gate (must stay inside the r* term)
    out_ref : (T, B, H)  per-step hidden states (time-major, lane-dense stores)
    hid_ref : (B, H)     final hidden state
    """
    T, B, H = out_ref.shape
    H2 = 2 * H

    # Hoisted ONCE (JAX does not CSE broadcast_in_dim across the unrolled loop).
    b_hn = jnp.broadcast_to(b_hn_ref[...], (B, H))

    h = jnp.zeros((B, H), jnp.float32)        # PyTorch GRU default h0 = 0

    # T is static & small -> Python unroll: all ref slices are static, whole chain
    # visible to the LLO scheduler.
    for t in range(T):
        gi_t = gi_ref[t]                      # (B, 3H) contiguous, full-vreg load

        # Split hidden matmul: r/z columns first, so EUP sigmoids overlap the MXU
        # while it produces the n-gate columns.  W_hh is read per-step from the ref
        # (static, lane-aligned slices) -> no 48-vreg live range across the loop.
        gh_rz = jnp.dot(h, w_hh_ref[:, 0:H2], preferred_element_type=jnp.float32)
        r = jax.nn.sigmoid(gi_t[:, 0:H] + gh_rz[:, 0:H])
        z = jax.nn.sigmoid(gi_t[:, H:H2] + gh_rz[:, H:H2])

        gh_n = jnp.dot(h, w_hh_ref[:, H2:], preferred_element_type=jnp.float32)
        n = jnp.tanh(gi_t[:, H2:] + r * (gh_n + b_hn))

        h = n + z * (h - n)                   # == (1-z)*n + z*h, one fewer VPU op
        out_ref[t] = h.astype(out_ref.dtype)  # lane-dense unmasked store

    hid_ref[...] = h.astype(hid_ref.dtype)    # single store, at the end only


def encoder_rnn_forward(x_ids, emb_table, w_ih, w_hh, b_ih, b_hh):
    """x_ids: (B, T) int32 token ids.  Returns (output (B,T,H), hidden (1,B,H))."""
    B, T = x_ids.shape
    H = emb_table.shape[1]

    # Embedding gather (time-major) + Dropout(eval) = identity  (plain-JAX glue).
    embedded_tm = emb_table[x_ids.T]                          # (T, B, H)

    # Hoist the input projection out of the serial recurrence: one big MXU matmul.
    # Fold b_ih fully, and fold b_hh into the r/z columns (outside the r* term);
    # only the n-gate hidden bias must remain inside the per-step computation.
    w_ih_t = w_ih.T                                           # (H, 3H)
    w_hh_t = w_hh.T                                           # (H, 3H)
    b_rz = jnp.concatenate([b_hh[:2 * H], jnp.zeros((H,), b_hh.dtype)])
    gi_all = embedded_tm @ w_ih_t + (b_ih + b_rz)             # (T, B, 3H) time-major
    b_hn = b_hh[2 * H:].reshape(1, H)                         # (1, H)

    # Batch sharding across TensorCores (useful on v7x's 2 TCs). Only split when the
    # half stays a multiple of 8 (sublane tiling constraint); collapses to grid=(1,)
    # at small B.
    if B >= 16 and (B // 2) % 8 == 0:
        b_block = B // 2
    else:
        b_block = B
    n_b = B // b_block

    out_tm, hidden = pl.pallas_call(
        gru_recurrence_kernel,
        out_shape=(
            jax.ShapeDtypeStruct((T, B, H), jnp.float32),
            jax.ShapeDtypeStruct((B, H), jnp.float32),
        ),
        grid_spec=pltpu.PrefetchScalarGridSpec(
            num_scalar_prefetch=0,
            grid=(n_b,),                                      # independent batch chunks
            in_specs=[
                pl.BlockSpec((T, b_block, 3 * H), lambda b: (0, b, 0)),   # gi (time-major)
                pl.BlockSpec((H, 3 * H), lambda b: (0, 0)),               # W_hh^T
                pl.BlockSpec((1, H), lambda b: (0, 0)),                   # b_hn
            ],
            out_specs=[
                pl.BlockSpec((T, b_block, H), lambda b: (0, b, 0)),       # output (time-major)
                pl.BlockSpec((b_block, H), lambda b: (b, 0)),             # final hidden
            ],
        ),
        compiler_params=pltpu.CompilerParams(
            dimension_semantics=("parallel",)),
    )(gi_all, w_hh_t, b_hn)

    output = jnp.transpose(out_tm, (1, 0, 2))                 # back to batch-first (B,T,H)
    return output, hidden.reshape(1, B, H)                    # (B,T,H), (num_layers=1,B,H)


def encoder_rnn_reference(x_ids, emb_table, w_ih, w_hh, b_ih, b_hh):
    """Pure-JAX reference (PyTorch GRU semantics, eval dropout)."""
    B, T = x_ids.shape
    H = emb_table.shape[1]
    embedded = emb_table[x_ids]                               # (B, T, H)

    def step(h, x_t):
        gi = x_t @ w_ih.T + b_ih
        gh = h @ w_hh.T + b_hh
        r = jax.nn.sigmoid(gi[:, 0:H] + gh[:, 0:H])
        z = jax.nn.sigmoid(gi[:, H:2 * H] + gh[:, H:2 * H])
        n = jnp.tanh(gi[:, 2 * H:] + r * gh[:, 2 * H:])
        h_new = (1.0 - z) * n + z * h
        return h_new, h_new

    h0 = jnp.zeros((B, H), jnp.float32)
    h_final, outs = jax.lax.scan(step, h0, jnp.transpose(embedded, (1, 0, 2)))
    return jnp.transpose(outs, (1, 0, 2)), h_final.reshape(1, B, H)


if __name__ == "__main__":
    # Small, deterministic setup (synthetic — no checkpoint loading).
    vocab_size = 20          # stands in for len(train_dataset.token_vocab)
    hidden_size = 128        # lane-aligned small stand-in for 512
    batch = 8
    seq_len = 8

    key = jax.random.PRNGKey(0)
    k_emb, k_wi, k_wh, k_bi, k_bh, k_x = jax.random.split(key, 6)

    bound = 1.0 / jnp.sqrt(hidden_size)
    emb_table = jax.random.normal(k_emb, (vocab_size, hidden_size), jnp.float32)
    w_ih = jax.random.uniform(k_wi, (3 * hidden_size, hidden_size), jnp.float32, -bound, bound)
    w_hh = jax.random.uniform(k_wh, (3 * hidden_size, hidden_size), jnp.float32, -bound, bound)
    b_ih = jax.random.uniform(k_bi, (3 * hidden_size,), jnp.float32, -bound, bound)
    b_hh = jax.random.uniform(k_bh, (3 * hidden_size,), jnp.float32, -bound, bound)

    x_ids = jax.random.randint(k_x, (batch, seq_len), 0, vocab_size, jnp.int32)

    output, hidden = encoder_rnn_forward(x_ids, emb_table, w_ih, w_hh, b_ih, b_hh)
    output = jax.block_until_ready(output)
    hidden = jax.block_until_ready(hidden)

    ref_out, ref_hid = encoder_rnn_reference(x_ids, emb_table, w_ih, w_hh, b_ih, b_hh)
    assert output.shape == (batch, seq_len, hidden_size)
    assert hidden.shape == (1, batch, hidden_size)
    assert jnp.allclose(output, ref_out, atol=1e-5, rtol=1e-5)
    assert jnp.allclose(hidden, ref_hid, atol=1e-5, rtol=1e-5)

    print("KERNEL_OK")
</pallas_src>

<mosaic_0001>
module attributes {stable_mosaic.version = 11 : i64} {
  func.func @gru_recurrence_kernel(%arg0: i32, %arg1: memref<8x8x384xf32, #tpu.memory_space<vmem>>, %arg2: memref<128x384xf32, #tpu.memory_space<vmem>>, %arg3: memref<1x128xf32, #tpu.memory_space<vmem>>, %arg4: memref<8x8x128xf32, #tpu.memory_space<vmem>>, %arg5: memref<8x128xf32, #tpu.memory_space<vmem>>) attributes {dimension_semantics = [#tpu.dimension_semantics<parallel>], iteration_bounds = array<i64: 1>, scalar_prefetch = 0 : i64, scratch_operands = 0 : i64, tpu.core_type = #tpu.core_type<tc>, window_params = [{transform_indices = @transform_0, window_bounds = array<i64: 8, 8, 384>}, {pipeline_mode = #tpu.pipeline_mode<synchronous>, transform_indices = @transform_1, window_bounds = array<i64: 128, 384>}, {pipeline_mode = #tpu.pipeline_mode<synchronous>, transform_indices = @transform_2, window_bounds = array<i64: 1, 128>}, {transform_indices = @transform_3, window_bounds = array<i64: 8, 8, 128>}, {transform_indices = @transform_4, window_bounds = array<i64: 8, 128>}]} {
    %c0 = arith.constant 0 : index
    %c0_0 = arith.constant 0 : index
    %0 = vector.load %arg3[%c0, %c0_0] : memref<1x128xf32, #tpu.memory_space<vmem>>, vector<1x128xf32>
    %1 = vector.shape_cast %0 : vector<1x128xf32> to vector<1x128xf32>
    %2 = vector.broadcast %1 : vector<1x128xf32> to vector<8x128xf32>
    %cst = arith.constant 0.000000e+00 : f32
    %3 = vector.broadcast %cst : f32 to vector<8x128xf32>
    %c0_1 = arith.constant 0 : index
    %c0_2 = arith.constant 0 : index
    %c0_3 = arith.constant 0 : index
    %4 = vector.load %arg1[%c0_1, %c0_2, %c0_3] : memref<8x8x384xf32, #tpu.memory_space<vmem>>, vector<1x8x384xf32>
    %5 = vector.shape_cast %4 : vector<1x8x384xf32> to vector<8x384xf32>
    %c0_4 = arith.constant 0 : index
    %c0_5 = arith.constant 0 : index
    %6 = vector.load %arg2[%c0_4, %c0_5] : memref<128x384xf32, #tpu.memory_space<vmem>>, vector<128x256xf32>
    %cst_6 = arith.constant dense<0.000000e+00> : vector<8x256xf32>
    %7 = tpu.matmul %3, %6, %cst_6 {dimension_numbers = #tpu.dot_dimension_numbers<[1], [0], [0], [1], [0, 0, 1, 1], [], []>} : vector<8x128xf32>, vector<128x256xf32>, vector<8x256xf32> -> vector<8x256xf32>
    %8 = vector.extract_strided_slice %5 {offsets = [0, 0], sizes = [8, 128], strides = [1, 1]} : vector<8x384xf32> to vector<8x128xf32>
    %9 = vector.extract_strided_slice %7 {offsets = [0, 0], sizes = [8, 128], strides = [1, 1]} : vector<8x256xf32> to vector<8x128xf32>
    %10 = arith.addf %8, %9 : vector<8x128xf32>
    %11 = arith.negf %10 : vector<8x128xf32>
    %12 = math.exp %11 : vector<8x128xf32>
    %cst_7 = arith.constant 1.000000e+00 : f32
    %13 = vector.broadcast %cst_7 : f32 to vector<8x128xf32>
    %14 = arith.addf %13, %12 : vector<8x128xf32>
    %15 = arith.divf %13, %14 : vector<8x128xf32>
    %16 = vector.extract_strided_slice %5 {offsets = [0, 128], sizes = [8, 128], strides = [1, 1]} : vector<8x384xf32> to vector<8x128xf32>
    %17 = vector.extract_strided_slice %7 {offsets = [0, 128], sizes = [8, 128], strides = [1, 1]} : vector<8x256xf32> to vector<8x128xf32>
    %18 = arith.addf %16, %17 : vector<8x128xf32>
    %19 = arith.negf %18 : vector<8x128xf32>
    %20 = math.exp %19 : vector<8x128xf32>
    %cst_8 = arith.constant 1.000000e+00 : f32
    %21 = vector.broadcast %cst_8 : f32 to vector<8x128xf32>
    %22 = arith.addf %21, %20 : vector<8x128xf32>
    %23 = arith.divf %21, %22 : vector<8x128xf32>
    %c0_9 = arith.constant 0 : index
    %c256 = arith.constant 256 : index
    %24 = vector.load %arg2[%c0_9, %c256] : memref<128x384xf32, #tpu.memory_space<vmem>>, vector<128x128xf32>
    %cst_10 = arith.constant dense<0.000000e+00> : vector<8x128xf32>
    %25 = tpu.matmul %3, %24, %cst_10 {dimension_numbers = #tpu.dot_dimension_numbers<[1], [0], [0], [1], [0, 0, 1, 1], [], []>} : vector<8x128xf32>, vector<128x128xf32>, vector<8x128xf32> -> vector<8x128xf32>
    %26 = vector.extract_strided_slice %5 {offsets = [0, 256], sizes = [8, 128], strides = [1, 1]} : vector<8x384xf32> to vector<8x128xf32>
    %27 = arith.addf %25, %2 : vector<8x128xf32>
    %28 = arith.mulf %15, %27 : vector<8x128xf32>
    %29 = arith.addf %26, %28 : vector<8x128xf32>
    %30 = math.tanh %29 : vector<8x128xf32>
    %31 = arith.subf %3, %30 : vector<8x128xf32>
    %32 = arith.mulf %23, %31 : vector<8x128xf32>
    %33 = arith.addf %30, %32 : vector<8x128xf32>
    %c0_11 = arith.constant 0 : index
    %c0_12 = arith.constant 0 : index
    %c0_13 = arith.constant 0 : index
    %34 = vector.load %arg4[%c0_11, %c0_12, %c0_13] : memref<8x8x128xf32, #tpu.memory_space<vmem>>, vector<1x8x128xf32>
    %35 = vector.shape_cast %34 : vector<1x8x128xf32> to vector<8x128xf32>
    %36 = vector.shape_cast %33 : vector<8x128xf32> to vector<1x8x128xf32>
    tpu.vector_store %arg4[%c0_11, %c0_12, %c0_13], %36 {strides = array<i32>} : memref<8x8x128xf32, #tpu.memory_space<vmem>>, vector<1x8x128xf32>,
    %c1 = arith.constant 1 : index
    %c0_14 = arith.constant 0 : index
    %c0_15 = arith.constant 0 : index
    %37 = vector.load %arg1[%c1, %c0_14, %c0_15] : memref<8x8x384xf32, #tpu.memory_space<vmem>>, vector<1x8x384xf32>
    %38 = vector.shape_cast %37 : vector<1x8x384xf32> to vector<8x384xf32>
    %c0_16 = arith.constant 0 : index
    %c0_17 = arith.constant 0 : index
    %39 = vector.load %arg2[%c0_16, %c0_17] : memref<128x384xf32, #tpu.memory_space<vmem>>, vector<128x256xf32>
    %cst_18 = arith.constant dense<0.000000e+00> : vector<8x256xf32>
    %40 = tpu.matmul %33, %39, %cst_18 {dimension_numbers = #tpu.dot_dimension_numbers<[1], [0], [0], [1], [0, 0, 1, 1], [], []>} : vector<8x128xf32>, vector<128x256xf32>, vector<8x256xf32> -> vector<8x256xf32>
    %41 = vector.extract_strided_slice %38 {offsets = [0, 0], sizes = [8, 128], strides = [1, 1]} : vector<8x384xf32> to vector<8x128xf32>
    %42 = vector.extract_strided_slice %40 {offsets = [0, 0], sizes = [8, 128], strides = [1, 1]} : vector<8x256xf32> to vector<8x128xf32>
    %43 = arith.addf %41, %42 : vector<8x128xf32>
    %44 = arith.negf %43 : vector<8x128xf32>
    %45 = math.exp %44 : vector<8x128xf32>
    %cst_19 = arith.constant 1.000000e+00 : f32
    %46 = vector.broadcast %cst_19 : f32 to vector<8x128xf32>
    %47 = arith.addf %46, %45 : vector<8x128xf32>
    %48 = arith.divf %46, %47 : vector<8x128xf32>
    %49 = vector.extract_strided_slice %38 {offsets = [0, 128], sizes = [8, 128], strides = [1, 1]} : vector<8x384xf32> to vector<8x128xf32>
    %50 = vector.extract_strided_slice %40 {offsets = [0, 128], sizes = [8, 128], strides = [1, 1]} : vector<8x256xf32> to vector<8x128xf32>
    %51 = arith.addf %49, %50 : vector<8x128xf32>
    %52 = arith.negf %51 : vector<8x128xf32>
    %53 = math.exp %52 : vector<8x128xf32>
    %cst_20 = arith.constant 1.000000e+00 : f32
    %54 = vector.broadcast %cst_20 : f32 to vector<8x128xf32>
    %55 = arith.addf %54, %53 : vector<8x128xf32>
    %56 = arith.divf %54, %55 : vector<8x128xf32>
    %c0_21 = arith.constant 0 : index
    %c256_22 = arith.constant 256 : index
    %57 = vector.load %arg2[%c0_21, %c256_22] : memref<128x384xf32, #tpu.memory_space<vmem>>, vector<128x128xf32>
    %cst_23 = arith.constant dense<0.000000e+00> : vector<8x128xf32>
    %58 = tpu.matmul %33, %57, %cst_23 {dimension_numbers = #tpu.dot_dimension_numbers<[1], [0], [0], [1], [0, 0, 1, 1], [], []>} : vector<8x128xf32>, vector<128x128xf32>, vector<8x128xf32> -> vector<8x128xf32>
    %59 = vector.extract_strided_slice %38 {offsets = [0, 256], sizes = [8, 128], strides = [1, 1]} : vector<8x384xf32> to vector<8x128xf32>
    %60 = arith.addf %58, %2 : vector<8x128xf32>
    %61 = arith.mulf %48, %60 : vector<8x128xf32>
    %62 = arith.addf %59, %61 : vector<8x128xf32>
    %63 = math.tanh %62 : vector<8x128xf32>
    %64 = arith.subf %33, %63 : vector<8x128xf32>
    %65 = arith.mulf %56, %64 : vector<8x128xf32>
    %66 = arith.addf %63, %65 : vector<8x128xf32>
    %c1_24 = arith.constant 1 : index
    %c0_25 = arith.constant 0 : index
    %c0_26 = arith.constant 0 : index
    %67 = vector.load %arg4[%c1_24, %c0_25, %c0_26] : memref<8x8x128xf32, #tpu.memory_space<vmem>>, vector<1x8x128xf32>
    %68 = vector.shape_cast %67 : vector<1x8x128xf32> to vector<8x128xf32>
    %69 = vector.shape_cast %66 : vector<8x128xf32> to vector<1x8x128xf32>
    tpu.vector_store %arg4[%c1_24, %c0_25, %c0_26], %69 {strides = array<i32>} : memref<8x8x128xf32, #tpu.memory_space<vmem>>, vector<1x8x128xf32>,
    %c2 = arith.constant 2 : index
    %c0_27 = arith.constant 0 : index
    %c0_28 = arith.constant 0 : index
    %70 = vector.load %arg1[%c2, %c0_27, %c0_28] : memref<8x8x384xf32, #tpu.memory_space<vmem>>, vector<1x8x384xf32>
    %71 = vector.shape_cast %70 : vector<1x8x384xf32> to vector<8x384xf32>
    %c0_29 = arith.constant 0 : index
    %c0_30 = arith.constant 0 : index
    %72 = vector.load %arg2[%c0_29, %c0_30] : memref<128x384xf32, #tpu.memory_space<vmem>>, vector<128x256xf32>
    %cst_31 = arith.constant dense<0.000000e+00> : vector<8x256xf32>
    %73 = tpu.matmul %66, %72, %cst_31 {dimension_numbers = #tpu.dot_dimension_numbers<[1], [0], [0], [1], [0, 0, 1, 1], [], []>} : vector<8x128xf32>, vector<128x256xf32>, vector<8x256xf32> -> vector<8x256xf32>
    %74 = vector.extract_strided_slice %71 {offsets = [0, 0], sizes = [8, 128], strides = [1, 1]} : vector<8x384xf32> to vector<8x128xf32>
    %75 = vector.extract_strided_slice %73 {offsets = [0, 0], sizes = [8, 128], strides = [1, 1]} : vector<8x256xf32> to vector<8x128xf32>
    %76 = arith.addf %74, %75 : vector<8x128xf32>
    %77 = arith.negf %76 : vector<8x128xf32>
    %78 = math.exp %77 : vector<8x128xf32>
    %cst_32 = arith.constant 1.000000e+00 : f32
    %79 = vector.broadcast %cst_32 : f32 to vector<8x128xf32>
    %80 = arith.addf %79, %78 : vector<8x128xf32>
    %81 = arith.divf %79, %80 : vector<8x128xf32>
    %82 = vector.extract_strided_slice %71 {offsets = [0, 128], sizes = [8, 128], strides = [1, 1]} : vector<8x384xf32> to vector<8x128xf32>
    %83 = vector.extract_strided_slice %73 {offsets = [0, 128], sizes = [8, 128], strides = [1, 1]} : vector<8x256xf32> to vector<8x128xf32>
    %84 = arith.addf %82, %83 : vector<8x128xf32>
    %85 = arith.negf %84 : vector<8x128xf32>
    %86 = math.exp %85 : vector<8x128xf32>
    %cst_33 = arith.constant 1.000000e+00 : f32
    %87 = vector.broadcast %cst_33 : f32 to vector<8x128xf32>
    %88 = arith.addf %87, %86 : vector<8x128xf32>
    %89 = arith.divf %87, %88 : vector<8x128xf32>
    %c0_34 = arith.constant 0 : index
    %c256_35 = arith.constant 256 : index
    %90 = vector.load %arg2[%c0_34, %c256_35] : memref<128x384xf32, #tpu.memory_space<vmem>>, vector<128x128xf32>
    %cst_36 = arith.constant dense<0.000000e+00> : vector<8x128xf32>
    %91 = tpu.matmul %66, %90, %cst_36 {dimension_numbers = #tpu.dot_dimension_numbers<[1], [0], [0], [1], [0, 0, 1, 1], [], []>} : vector<8x128xf32>, vector<128x128xf32>, vector<8x128xf32> -> vector<8x128xf32>
    %92 = vector.extract_strided_slice %71 {offsets = [0, 256], sizes = [8, 128], strides = [1, 1]} : vector<8x384xf32> to vector<8x128xf32>
    %93 = arith.addf %91, %2 : vector<8x128xf32>
    %94 = arith.mulf %81, %93 : vector<8x128xf32>
    %95 = arith.addf %92, %94 : vector<8x128xf32>
    %96 = math.tanh %95 : vector<8x128xf32>
    %97 = arith.subf %66, %96 : vector<8x128xf32>
    %98 = arith.mulf %89, %97 : vector<8x128xf32>
    %99 = arith.addf %96, %98 : vector<8x128xf32>
    %c2_37 = arith.constant 2 : index
    %c0_38 = arith.constant 0 : index
    %c0_39 = arith.constant 0 : index
    %100 = vector.load %arg4[%c2_37, %c0_38, %c0_39] : memref<8x8x128xf32, #tpu.memory_space<vmem>>, vector<1x8x128xf32>
    %101 = vector.shape_cast %100 : vector<1x8x128xf32> to vector<8x128xf32>
    %102 = vector.shape_cast %99 : vector<8x128xf32> to vector<1x8x128xf32>
    tpu.vector_store %arg4[%c2_37, %c0_38, %c0_39], %102 {strides = array<i32>} : memref<8x8x128xf32, #tpu.memory_space<vmem>>, vector<1x8x128xf32>,
    %c3 = arith.constant 3 : index
    %c0_40 = arith.constant 0 : index
    %c0_41 = arith.constant 0 : index
    %103 = vector.load %arg1[%c3, %c0_40, %c0_41] : memref<8x8x384xf32, #tpu.memory_space<vmem>>, vector<1x8x384xf32>
    %104 = vector.shape_cast %103 : vector<1x8x384xf32> to vector<8x384xf32>
    %c0_42 = arith.constant 0 : index
    %c0_43 = arith.constant 0 : index
    %105 = vector.load %arg2[%c0_42, %c0_43] : memref<128x384xf32, #tpu.memory_space<vmem>>, vector<128x256xf32>
    %cst_44 = arith.constant dense<0.000000e+00> : vector<8x256xf32>
    %106 = tpu.matmul %99, %105, %cst_44 {dimension_numbers = #tpu.dot_dimension_numbers<[1], [0], [0], [1], [0, 0, 1, 1], [], []>} : vector<8x128xf32>, vector<128x256xf32>, vector<8x256xf32> -> vector<8x256xf32>
    %107 = vector.extract_strided_slice %104 {offsets = [0, 0], sizes = [8, 128], strides = [1, 1]} : vector<8x384xf32> to vector<8x128xf32>
    %108 = vector.extract_strided_slice %106 {offsets = [0, 0], sizes = [8, 128], strides = [1, 1]} : vector<8x256xf32> to vector<8x128xf32>
    %109 = arith.addf %107, %108 : vector<8x128xf32>
    %110 = arith.negf %109 : vector<8x128xf32>
    %111 = math.exp %110 : vector<8x128xf32>
    %cst_45 = arith.constant 1.000000e+00 : f32
    %112 = vector.broadcast %cst_45 : f32 to vector<8x128xf32>
    %113 = arith.addf %112, %111 : vector<8x128xf32>
    %114 = arith.divf %112, %113 : vector<8x128xf32>
    %115 = vector.extract_strided_slice %104 {offsets = [0, 128], sizes = [8, 128], strides = [1, 1]} : vector<8x384xf32> to vector<8x128xf32>
    %116 = vector.extract_strided_slice %106 {offsets = [0, 128], sizes = [8, 128], strides = [1, 1]} : vector<8x256xf32> to vector<8x128xf32>
    %117 = arith.addf %115, %116 : vector<8x128xf32>
    %118 = arith.negf %117 : vector<8x128xf32>
    %119 = math.exp %118 : vector<8x128xf32>
    %cst_46 = arith.constant 1.000000e+00 : f32
    %120 = vector.broadcast %cst_46 : f32 to vector<8x128xf32>
    %121 = arith.addf %120, %119 : vector<8x128xf32>
    %122 = arith.divf %120, %121 : vector<8x128xf32>
    %c0_47 = arith.constant 0 : index
    %c256_48 = arith.constant 256 : index
    %123 = vector.load %arg2[%c0_47, %c256_48] : memref<128x384xf32, #tpu.memory_space<vmem>>, vector<128x128xf32>
    %cst_49 = arith.constant dense<0.000000e+00> : vector<8x128xf32>
    %124 = tpu.matmul %99, %123, %cst_49 {dimension_numbers = #tpu.dot_dimension_numbers<[1], [0], [0], [1], [0, 0, 1, 1], [], []>} : vector<8x128xf32>, vector<128x128xf32>, vector<8x128xf32> -> vector<8x128xf32>
    %125 = vector.extract_strided_slice %104 {offsets = [0, 256], sizes = [8, 128], strides = [1, 1]} : vector<8x384xf32> to vector<8x128xf32>
    %126 = arith.addf %124, %2 : vector<8x128xf32>
    %127 = arith.mulf %114, %126 : vector<8x128xf32>
    %128 = arith.addf %125, %127 : vector<8x128xf32>
    %129 = math.tanh %128 : vector<8x128xf32>
    %130 = arith.subf %99, %129 : vector<8x128xf32>
    %131 = arith.mulf %122, %130 : vector<8x128xf32>
    %132 = arith.addf %129, %131 : vector<8x128xf32>
    %c3_50 = arith.constant 3 : index
    %c0_51 = arith.constant 0 : index
    %c0_52 = arith.constant 0 : index
    %133 = vector.load %arg4[%c3_50, %c0_51, %c0_52] : memref<8x8x128xf32, #tpu.memory_space<vmem>>, vector<1x8x128xf32>
    %134 = vector.shape_cast %133 : vector<1x8x128xf32> to vector<8x128xf32>
    %135 = vector.shape_cast %132 : vector<8x128xf32> to vector<1x8x128xf32>
    tpu.vector_store %arg4[%c3_50, %c0_51, %c0_52], %135 {strides = array<i32>} : memref<8x8x128xf32, #tpu.memory_space<vmem>>, vector<1x8x128xf32>,
    %c4 = arith.constant 4 : index
    %c0_53 = arith.constant 0 : index
    %c0_54 = arith.constant 0 : index
    %136 = vector.load %arg1[%c4, %c0_53, %c0_54] : memref<8x8x384xf32, #tpu.memory_space<vmem>>, vector<1x8x384xf32>
    %137 = vector.shape_cast %136 : vector<1x8x384xf32> to vector<8x384xf32>
    %c0_55 = arith.constant 0 : index
    %c0_56 = arith.constant 0 : index
    %138 = vector.load %arg2[%c0_55, %c0_56] : memref<128x384xf32, #tpu.memory_space<vmem>>, vector<128x256xf32>
    %cst_57 = arith.constant dense<0.000000e+00> : vector<8x256xf32>
    %139 = tpu.matmul %132, %138, %cst_57 {dimension_numbers = #tpu.dot_dimension_numbers<[1], [0], [0], [1], [0, 0, 1, 1], [], []>} : vector<8x128xf32>, vector<128x256xf32>, vector<8x256xf32> -> vector<8x256xf32>
    %140 = vector.extract_strided_slice %137 {offsets = [0, 0], sizes = [8, 128], strides = [1, 1]} : vector<8x384xf32> to vector<8x128xf32>
    %141 = vector.extract_strided_slice %139 {offsets = [0, 0], sizes = [8, 128], strides = [1, 1]} : vector<8x256xf32> to vector<8x128xf32>
    %142 = arith.addf %140, %141 : vector<8x128xf32>
    %143 = arith.negf %142 : vector<8x128xf32>
    %144 = math.exp %143 : vector<8x128xf32>
    %cst_58 = arith.constant 1.000000e+00 : f32
    %145 = vector.broadcast %cst_58 : f32 to vector<8x128xf32>
    %146 = arith.addf %145, %144 : vector<8x128xf32>
    %147 = arith.divf %145, %146 : vector<8x128xf32>
    %148 = vector.extract_strided_slice %137 {offsets = [0, 128], sizes = [8, 128], strides = [1, 1]} : vector<8x384xf32> to vector<8x128xf32>
    %149 = vector.extract_strided_slice %139 {offsets = [0, 128], sizes = [8, 128], strides = [1, 1]} : vector<8x256xf32> to vector<8x128xf32>
    %150 = arith.addf %148, %149 : vector<8x128xf32>
    %151 = arith.negf %150 : vector<8x128xf32>
    %152 = math.exp %151 : vector<8x128xf32>
    %cst_59 = arith.constant 1.000000e+00 : f32
    %153 = vector.broadcast %cst_59 : f32 to vector<8x128xf32>
    %154 = arith.addf %153, %152 : vector<8x128xf32>
    %155 = arith.divf %153, %154 : vector<8x128xf32>
    %c0_60 = arith.constant 0 : index
    %c256_61 = arith.constant 256 : index
    %156 = vector.load %arg2[%c0_60, %c256_61] : memref<128x384xf32, #tpu.memory_space<vmem>>, vector<128x128xf32>
    %cst_62 = arith.constant dense<0.000000e+00> : vector<8x128xf32>
    %157 = tpu.matmul %132, %156, %cst_62 {dimension_numbers = #tpu.dot_dimension_numbers<[1], [0], [0], [1], [0, 0, 1, 1], [], []>} : vector<8x128xf32>, vector<128x128xf32>, vector<8x128xf32> -> vector<8x128xf32>
    %158 = vector.extract_strided_slice %137 {offsets = [0, 256], sizes = [8, 128], strides = [1, 1]} : vector<8x384xf32> to vector<8x128xf32>
    %159 = arith.addf %157, %2 : vector<8x128xf32>
    %160 = arith.mulf %147, %159 : vector<8x128xf32>
    %161 = arith.addf %158, %160 : vector<8x128xf32>
    %162 = math.tanh %161 : vector<8x128xf32>
    %163 = arith.subf %132, %162 : vector<8x128xf32>
    %164 = arith.mulf %155, %163 : vector<8x128xf32>
    %165 = arith.addf %162, %164 : vector<8x128xf32>
    %c4_63 = arith.constant 4 : index
    %c0_64 = arith.constant 0 : index
    %c0_65 = arith.constant 0 : index
    %166 = vector.load %arg4[%c4_63, %c0_64, %c0_65] : memref<8x8x128xf32, #tpu.memory_space<vmem>>, vector<1x8x128xf32>
    %167 = vector.shape_cast %166 : vector<1x8x128xf32> to vector<8x128xf32>
    %168 = vector.shape_cast %165 : vector<8x128xf32> to vector<1x8x128xf32>
    tpu.vector_store %arg4[%c4_63, %c0_64, %c0_65], %168 {strides = array<i32>} : memref<8x8x128xf32, #tpu.memory_space<vmem>>, vector<1x8x128xf32>,
    %c5 = arith.constant 5 : index
    %c0_66 = arith.constant 0 : index
    %c0_67 = arith.constant 0 : index
    %169 = vector.load %arg1[%c5, %c0_66, %c0_67] : memref<8x8x384xf32, #tpu.memory_space<vmem>>, vector<1x8x384xf32>
    %170 = vector.shape_cast %169 : vector<1x8x384xf32> to vector<8x384xf32>
    %c0_68 = arith.constant 0 : index
    %c0_69 = arith.constant 0 : index
    %171 = vector.load %arg2[%c0_68, %c0_69] : memref<128x384xf32, #tpu.memory_space<vmem>>, vector<128x256xf32>
    %cst_70 = arith.constant dense<0.000000e+00> : vector<8x256xf32>
    %172 = tpu.matmul %165, %171, %cst_70 {dimension_numbers = #tpu.dot_dimension_numbers<[1], [0], [0], [1], [0, 0, 1, 1], [], []>} : vector<8x128xf32>, vector<128x256xf32>, vector<8x256xf32> -> vector<8x256xf32>
    %173 = vector.extract_strided_slice %170 {offsets = [0, 0], sizes = [8, 128], strides = [1, 1]} : vector<8x384xf32> to vector<8x128xf32>
    %174 = vector.extract_strided_slice %172 {offsets = [0, 0], sizes = [8, 128], strides = [1, 1]} : vector<8x256xf32> to vector<8x128xf32>
    %175 = arith.addf %173, %174 : vector<8x128xf32>
    %176 = arith.negf %175 : vector<8x128xf32>
    %177 = math.exp %176 : vector<8x128xf32>
    %cst_71 = arith.constant 1.000000e+00 : f32
    %178 = vector.broadcast %cst_71 : f32 to vector<8x128xf32>
    %179 = arith.addf %178, %177 : vector<8x128xf32>
    %180 = arith.divf %178, %179 : vector<8x128xf32>
    %181 = vector.extract_strided_slice %170 {offsets = [0, 128], sizes = [8, 128], strides = [1, 1]} : vector<8x384xf32> to vector<8x128xf32>
    %182 = vector.extract_strided_slice %172 {offsets = [0, 128], sizes = [8, 128], strides = [1, 1]} : vector<8x256xf32> to vector<8x128xf32>
    %183 = arith.addf %181, %182 : vector<8x128xf32>
    %184 = arith.negf %183 : vector<8x128xf32>
    %185 = math.exp %184 : vector<8x128xf32>
    %cst_72 = arith.constant 1.000000e+00 : f32
    %186 = vector.broadcast %cst_72 : f32 to vector<8x128xf32>
    %187 = arith.addf %186, %185 : vector<8x128xf32>
    %188 = arith.divf %186, %187 : vector<8x128xf32>
    %c0_73 = arith.constant 0 : index
    %c256_74 = arith.constant 256 : index
    %189 = vector.load %arg2[%c0_73, %c256_74] : memref<128x384xf32, #tpu.memory_space<vmem>>, vector<128x128xf32>
    %cst_75 = arith.constant dense<0.000000e+00> : vector<8x128xf32>
    %190 = tpu.matmul %165, %189, %cst_75 {dimension_numbers = #tpu.dot_dimension_numbers<[1], [0], [0], [1], [0, 0, 1, 1], [], []>} : vector<8x128xf32>, vector<128x128xf32>, vector<8x128xf32> -> vector<8x128xf32>
    %191 = vector.extract_strided_slice %170 {offsets = [0, 256], sizes = [8, 128], strides = [1, 1]} : vector<8x384xf32> to vector<8x128xf32>
    %192 = arith.addf %190, %2 : vector<8x128xf32>
    %193 = arith.mulf %180, %192 : vector<8x128xf32>
    %194 = arith.addf %191, %193 : vector<8x128xf32>
    %195 = math.tanh %194 : vector<8x128xf32>
    %196 = arith.subf %165, %195 : vector<8x128xf32>
    %197 = arith.mulf %188, %196 : vector<8x128xf32>
    %198 = arith.addf %195, %197 : vector<8x128xf32>
    %c5_76 = arith.constant 5 : index
    %c0_77 = arith.constant 0 : index
    %c0_78 = arith.constant 0 : index
    %199 = vector.load %arg4[%c5_76, %c0_77, %c0_78] : memref<8x8x128xf32, #tpu.memory_space<vmem>>, vector<1x8x128xf32>
    %200 = vector.shape_cast %199 : vector<1x8x128xf32> to vector<8x128xf32>
    %201 = vector.shape_cast %198 : vector<8x128xf32> to vector<1x8x128xf32>
    tpu.vector_store %arg4[%c5_76, %c0_77, %c0_78], %201 {strides = array<i32>} : memref<8x8x128xf32, #tpu.memory_space<vmem>>, vector<1x8x128xf32>,
    %c6 = arith.constant 6 : index
    %c0_79 = arith.constant 0 : index
    %c0_80 = arith.constant 0 : index
    %202 = vector.load %arg1[%c6, %c0_79, %c0_80] : memref<8x8x384xf32, #tpu.memory_space<vmem>>, vector<1x8x384xf32>
    %203 = vector.shape_cast %202 : vector<1x8x384xf32> to vector<8x384xf32>
    %c0_81 = arith.constant 0 : index
    %c0_82 = arith.constant 0 : index
    %204 = vector.load %arg2[%c0_81, %c0_82] : memref<128x384xf32, #tpu.memory_space<vmem>>, vector<128x256xf32>
    %cst_83 = arith.constant dense<0.000000e+00> : vector<8x256xf32>
    %205 = tpu.matmul %198, %204, %cst_83 {dimension_numbers = #tpu.dot_dimension_numbers<[1], [0], [0], [1], [0, 0, 1, 1], [], []>} : vector<8x128xf32>, vector<128x256xf32>, vector<8x256xf32> -> vector<8x256xf32>
    %206 = vector.extract_strided_slice %203 {offsets = [0, 0], sizes = [8, 128], strides = [1, 1]} : vector<8x384xf32> to vector<8x128xf32>
    %207 = vector.extract_strided_slice %205 {offsets = [0, 0], sizes = [8, 128], strides = [1, 1]} : vector<8x256xf32> to vector<8x128xf32>
    %208 = arith.addf %206, %207 : vector<8x128xf32>
    %209 = arith.negf %208 : vector<8x128xf32>
    %210 = math.exp %209 : vector<8x128xf32>
    %cst_84 = arith.constant 1.000000e+00 : f32
    %211 = vector.broadcast %cst_84 : f32 to vector<8x128xf32>
    %212 = arith.addf %211, %210 : vector<8x128xf32>
    %213 = arith.divf %211, %212 : vector<8x128xf32>
    %214 = vector.extract_strided_slice %203 {offsets = [0, 128], sizes = [8, 128], strides = [1, 1]} : vector<8x384xf32> to vector<8x128xf32>
    %215 = vector.extract_strided_slice %205 {offsets = [0, 128], sizes = [8, 128], strides = [1, 1]} : vector<8x256xf32> to vector<8x128xf32>
    %216 = arith.addf %214, %215 : vector<8x128xf32>
    %217 = arith.negf %216 : vector<8x128xf32>
    %218 = math.exp %217 : vector<8x128xf32>
    %cst_85 = arith.constant 1.000000e+00 : f32
    %219 = vector.broadcast %cst_85 : f32 to vector<8x128xf32>
    %220 = arith.addf %219, %218 : vector<8x128xf32>
    %221 = arith.divf %219, %220 : vector<8x128xf32>
    %c0_86 = arith.constant 0 : index
    %c256_87 = arith.constant 256 : index
    %222 = vector.load %arg2[%c0_86, %c256_87] : memref<128x384xf32, #tpu.memory_space<vmem>>, vector<128x128xf32>
    %cst_88 = arith.constant dense<0.000000e+00> : vector<8x128xf32>
    %223 = tpu.matmul %198, %222, %cst_88 {dimension_numbers = #tpu.dot_dimension_numbers<[1], [0], [0], [1], [0, 0, 1, 1], [], []>} : vector<8x128xf32>, vector<128x128xf32>, vector<8x128xf32> -> vector<8x128xf32>
    %224 = vector.extract_strided_slice %203 {offsets = [0, 256], sizes = [8, 128], strides = [1, 1]} : vector<8x384xf32> to vector<8x128xf32>
    %225 = arith.addf %223, %2 : vector<8x128xf32>
    %226 = arith.mulf %213, %225 : vector<8x128xf32>
    %227 = arith.addf %224, %226 : vector<8x128xf32>
    %228 = math.tanh %227 : vector<8x128xf32>
    %229 = arith.subf %198, %228 : vector<8x128xf32>
    %230 = arith.mulf %221, %229 : vector<8x128xf32>
    %231 = arith.addf %228, %230 : vector<8x128xf32>
    %c6_89 = arith.constant 6 : index
    %c0_90 = arith.constant 0 : index
    %c0_91 = arith.constant 0 : index
    %232 = vector.load %arg4[%c6_89, %c0_90, %c0_91] : memref<8x8x128xf32, #tpu.memory_space<vmem>>, vector<1x8x128xf32>
    %233 = vector.shape_cast %232 : vector<1x8x128xf32> to vector<8x128xf32>
    %234 = vector.shape_cast %231 : vector<8x128xf32> to vector<1x8x128xf32>
    tpu.vector_store %arg4[%c6_89, %c0_90, %c0_91], %234 {strides = array<i32>} : memref<8x8x128xf32, #tpu.memory_space<vmem>>, vector<1x8x128xf32>,
    %c7 = arith.constant 7 : index
    %c0_92 = arith.constant 0 : index
    %c0_93 = arith.constant 0 : index
    %235 = vector.load %arg1[%c7, %c0_92, %c0_93] : memref<8x8x384xf32, #tpu.memory_space<vmem>>, vector<1x8x384xf32>
    %236 = vector.shape_cast %235 : vector<1x8x384xf32> to vector<8x384xf32>
    %c0_94 = arith.constant 0 : index
    %c0_95 = arith.constant 0 : index
    %237 = vector.load %arg2[%c0_94, %c0_95] : memref<128x384xf32, #tpu.memory_space<vmem>>, vector<128x256xf32>
    %cst_96 = arith.constant dense<0.000000e+00> : vector<8x256xf32>
    %238 = tpu.matmul %231, %237, %cst_96 {dimension_numbers = #tpu.dot_dimension_numbers<[1], [0], [0], [1], [0, 0, 1, 1], [], []>} : vector<8x128xf32>, vector<128x256xf32>, vector<8x256xf32> -> vector<8x256xf32>
    %239 = vector.extract_strided_slice %236 {offsets = [0, 0], sizes = [8, 128], strides = [1, 1]} : vector<8x384xf32> to vector<8x128xf32>
    %240 = vector.extract_strided_slice %238 {offsets = [0, 0], sizes = [8, 128], strides = [1, 1]} : vector<8x256xf32> to vector<8x128xf32>
    %241 = arith.addf %239, %240 : vector<8x128xf32>
    %242 = arith.negf %241 : vector<8x128xf32>
    %243 = math.exp %242 : vector<8x128xf32>
    %cst_97 = arith.constant 1.000000e+00 : f32
    %244 = vector.broadcast %cst_97 : f32 to vector<8x128xf32>
    %245 = arith.addf %244, %243 : vector<8x128xf32>
    %246 = arith.divf %244, %245 : vector<8x128xf32>
    %247 = vector.extract_strided_slice %236 {offsets = [0, 128], sizes = [8, 128], strides = [1, 1]} : vector<8x384xf32> to vector<8x128xf32>
    %248 = vector.extract_strided_slice %238 {offsets = [0, 128], sizes = [8, 128], strides = [1, 1]} : vector<8x256xf32> to vector<8x128xf32>
    %249 = arith.addf %247, %248 : vector<8x128xf32>
    %250 = arith.negf %249 : vector<8x128xf32>
    %251 = math.exp %250 : vector<8x128xf32>
    %cst_98 = arith.constant 1.000000e+00 : f32
    %252 = vector.broadcast %cst_98 : f32 to vector<8x128xf32>
    %253 = arith.addf %252, %251 : vector<8x128xf32>
    %254 = arith.divf %252, %253 : vector<8x128xf32>
    %c0_99 = arith.constant 0 : index
    %c256_100 = arith.constant 256 : index
    %255 = vector.load %arg2[%c0_99, %c256_100] : memref<128x384xf32, #tpu.memory_space<vmem>>, vector<128x128xf32>
    %cst_101 = arith.constant dense<0.000000e+00> : vector<8x128xf32>
    %256 = tpu.matmul %231, %255, %cst_101 {dimension_numbers = #tpu.dot_dimension_numbers<[1], [0], [0], [1], [0, 0, 1, 1], [], []>} : vector<8x128xf32>, vector<128x128xf32>, vector<8x128xf32> -> vector<8x128xf32>
    %257 = vector.extract_strided_slice %236 {offsets = [0, 256], sizes = [8, 128], strides = [1, 1]} : vector<8x384xf32> to vector<8x128xf32>
    %258 = arith.addf %256, %2 : vector<8x128xf32>
    %259 = arith.mulf %246, %258 : vector<8x128xf32>
    %260 = arith.addf %257, %259 : vector<8x128xf32>
    %261 = math.tanh %260 : vector<8x128xf32>
    %262 = arith.subf %231, %261 : vector<8x128xf32>
    %263 = arith.mulf %254, %262 : vector<8x128xf32>
    %264 = arith.addf %261, %263 : vector<8x128xf32>
    %c7_102 = arith.constant 7 : index
    %c0_103 = arith.constant 0 : index
    %c0_104 = arith.constant 0 : index
    %265 = vector.load %arg4[%c7_102, %c0_103, %c0_104] : memref<8x8x128xf32, #tpu.memory_space<vmem>>, vector<1x8x128xf32>
    %266 = vector.shape_cast %265 : vector<1x8x128xf32> to vector<8x128xf32>
    %267 = vector.shape_cast %264 : vector<8x128xf32> to vector<1x8x128xf32>
    tpu.vector_store %arg4[%c7_102, %c0_103, %c0_104], %267 {strides = array<i32>} : memref<8x8x128xf32, #tpu.memory_space<vmem>>, vector<1x8x128xf32>,
    %c0_105 = arith.constant 0 : index
    %c0_106 = arith.constant 0 : index
    %268 = vector.load %arg5[%c0_105, %c0_106] : memref<8x128xf32, #tpu.memory_space<vmem>>, vector<8x128xf32>
    tpu.vector_store %arg5[%c0_105, %c0_106], %264 {strides = array<i32>} : memref<8x128xf32, #tpu.memory_space<vmem>>, vector<8x128xf32>,
    return
  }
  func.func @transform_0(%arg0: i32) -> (i32, i32, i32) {
    %c0_i32 = arith.constant 0 : i32
    %c0_i32_0 = arith.constant 0 : i32
    %c0_i32_1 = arith.constant 0 : i32
    return %c0_i32, %arg0, %c0_i32_0 : i32, i32, i32
  }
  func.func @transform_1(%arg0: i32) -> (i32, i32) {
    %c0_i32 = arith.constant 0 : i32
    %c0_i32_0 = arith.constant 0 : i32
    %c0_i32_1 = arith.constant 0 : i32
    return %c0_i32, %c0_i32_0 : i32, i32
  }
  func.func @transform_2(%arg0: i32) -> (i32, i32) {
    %c0_i32 = arith.constant 0 : i32
    %c0_i32_0 = arith.constant 0 : i32
    %c0_i32_1 = arith.constant 0 : i32
    return %c0_i32, %c0_i32_0 : i32, i32
  }
  func.func @transform_3(%arg0: i32) -> (i32, i32, i32) {
    %c0_i32 = arith.constant 0 : i32
    %c0_i32_0 = arith.constant 0 : i32
    %c0_i32_1 = arith.constant 0 : i32
    return %c0_i32, %arg0, %c0_i32_0 : i32, i32, i32
  }
  func.func @transform_4(%arg0: i32) -> (i32, i32) {
    %c0_i32 = arith.constant 0 : i32
    %c0_i32_0 = arith.constant 0 : i32
    return %arg0, %c0_i32 : i32, i32
  }
}

</mosaic_0001>

<llo_original>
// kernel: tpu_custom_call.1
$region0: #{tpu_custom_call.1}
  #allocation0 [shape = 'u32[]', space=smem, size = 0x4, offset = 0x4, fixed_abs, tag = 'smem constant byte address 0x4 - core index']
  #allocation1 [shape = 'u32[144,128]{1,0:T(1,128)}', space=vmem, size = 0x12000, scoped, tag = 'internal scratch']
  %s0 = inlined_call_operand.hbm [shape: f32[8,8,384], index: 0, kind: input, shape index: {}]
  %s1 = inlined_call_operand.hbm [shape: f32[128,384], index: 1, kind: input, shape index: {}]
  %s2 = inlined_call_operand.vmem [shape: f32[1,128], index: 2, kind: input, shape index: {}]
  %s3 = inlined_call_operand.hbm [shape: f32[8,8,128], index: 3, kind: output, shape index: {0}]
  %s4 = inlined_call_operand.hbm [shape: f32[8,128], index: 4, kind: output, shape index: {1}]
  %5 = xla_tuple %s3, %s4
  %s6 = sld [smem:[#allocation0]]
  $region38: #{tpu_custom_call.1} parent=0
    _
  %s8 = ssub.s32 1, %s6
  %s9 = scalar_select 0, %s8, %s6
  $region1: #{tpu_custom_call.1} parent=0
    #allocation2 [shape = 'u8[98304]{0}', space=vmem, size = 0x18000, scoped, tag = 'input window, operand 0, single buffered']
    #allocation3 [shape = 's32[1]{0}', space=sflag, size = 0x4, scoped, tag = 'scoped memory for tpu_custom_call.1']
    #allocation4 [shape = 's32[1]{0}', space=sflag, size = 0x4, scoped, tag = 'scoped memory for tpu_custom_call.1']
    #allocation5 [shape = 'u8[196608]{0}', space=vmem, size = 0x30000, scoped, tag = 'input window, operand 1, single buffered']
    #allocation6 [shape = 's32[1]{0}', space=sflag, size = 0x4, scoped, tag = 'scoped memory for tpu_custom_call.1']
    #allocation7 [shape = 'u8[32768]{0}', space=vmem, size = 0x8000, scoped, tag = 'output window, operand 0, single buffered']
    #allocation8 [shape = 'u8[4096]{0}', space=vmem, size = 0x1000, scoped, tag = 'output window, operand 1, single buffered']
    #allocation9 [shape = 's32[1]{0}', space=sflag, size = 0x4, scoped, tag = 'scoped memory for tpu_custom_call.1']
    %10 = vsyncpa [#allocation3], 0
    %11 = vsyncpa [#allocation6], 0
    %12 = vsyncpa [#allocation4], 0
    %13 = vsyncpa [#allocation9], 0
    // Predicated region
    $region2: #{tpu_custom_call.1} parent=1 // pred_check
      _
    $region3: #{tpu_custom_call.1} parent=1 // pred_check_branch
      %15 = sbr.rel (0) target = $region5
    $region4: #{tpu_custom_call.1} parent=1 // pred_region
      %s17 = ssub.s32 3072, 3072
      %18 = vsyncadd [#allocation3], %s17
      %s19 = sshll.u32 [#allocation2], 4
      %s20 = int_to_ptr.vmem [resolvable:$true] %s19
      %25 = dma.hbm_to_vmem [thread:$0]  %s0, 3072, %s20, [#allocation3], 384, 384, 24
    $region5: #{tpu_custom_call.1} parent=1 // pred_fallthru
      _
    // Predicated region
    $region6: #{tpu_custom_call.1} parent=1 // pred_check
      _
    $region7: #{tpu_custom_call.1} parent=1 // pred_check_branch
      %27 = sbr.rel (0) target = $region9
    $region8: #{tpu_custom_call.1} parent=1 // pred_region
      %s29 = ssub.s32 6144, 6144
      %30 = vsyncadd [#allocation6], %s29
      %s31 = sshll.u32 [#allocation5], 4
      %s32 = int_to_ptr.vmem [resolvable:$true] %s31
      %37 = dma.hbm_to_vmem [thread:$0]  %s1, 6144, %s32, [#allocation6], 384, 384, 24
    $region9: #{tpu_custom_call.1} parent=1 // pred_fallthru
      _
    // Predicated region
    $region10: #{tpu_custom_call.1} parent=1 // pred_check
      _
    $region11: #{tpu_custom_call.1} parent=1 // pred_check_branch
      %39 = sbr.rel (0) target = $region13
    $region12: #{tpu_custom_call.1} parent=1 // pred_region
      _
    $region13: #{tpu_custom_call.1} parent=1 // pred_fallthru
      _
    // Predicated region
    $region14: #{tpu_custom_call.1} parent=1 // pred_check
      _
    $region15: #{tpu_custom_call.1} parent=1 // pred_check_branch
      %41 = sbr.rel (0) target = $region17
    $region16: #{tpu_custom_call.1} parent=1 // pred_region
      %42 = dma.done [#allocation3], 3072
    $region17: #{tpu_custom_call.1} parent=1 // pred_fallthru
      _
    // Predicated region
    $region18: #{tpu_custom_call.1} parent=1 // pred_check
      _
    $region19: #{tpu_custom_call.1} parent=1 // pred_check_branch
      %44 = sbr.rel (0) target = $region21
    $region20: #{tpu_custom_call.1} parent=1 // pred_region
      %45 = dma.done [#allocation6], 6144
    $region21: #{tpu_custom_call.1} parent=1 // pred_fallthru
      _
    %v46 = vld [vmem:[%s2] sm:$0x1]
    %v48 = vlaneseq
    %v49 = vshrl.u32 %v48, 7
    %v50 = vsub.s32 0, %v49
    %v51 = vrot.slane %v46, %v50
    %v53 = vld [vmem:[#allocation2] sm:$0xff]
    %v54 = vld [vmem:[#allocation2 + $0x8] sm:$0xff]
    %v55 = vld [vmem:[#allocation2 + $0x10] sm:$0xff]
    %v56 = vld [vmem:[#allocation5] sm:$0xff]
    %v57 = vld [vmem:[#allocation5 + $0x8] sm:$0xff]
    %v58 = vld [vmem:[#allocation5 + $0x18] sm:$0xff]
    %v59 = vld [vmem:[#allocation5 + $0x20] sm:$0xff]
    %v60 = vld [vmem:[#allocation5 + $0x30] sm:$0xff]
    %v61 = vld [vmem:[#allocation5 + $0x38] sm:$0xff]
    %v62 = vld [vmem:[#allocation5 + $0x48] sm:$0xff]
    %v63 = vld [vmem:[#allocation5 + $0x50] sm:$0xff]
    %v64 = vld [vmem:[#allocation5 + $0x60] sm:$0xff]
    %v65 = vld [vmem:[#allocation5 + $0x68] sm:$0xff]
    %v66 = vld [vmem:[#allocation5 + $0x78] sm:$0xff]
    %v67 = vld [vmem:[#allocation5 + $0x80] sm:$0xff]
    %v68 = vld [vmem:[#allocation5 + $0x90] sm:$0xff]
    %v69 = vld [vmem:[#allocation5 + $0x98] sm:$0xff]
    %v70 = vld [vmem:[#allocation5 + $0xa8] sm:$0xff]
    %v71 = vld [vmem:[#allocation5 + $0xb0] sm:$0xff]
    %v72 = vld [vmem:[#allocation5 + $0xc0] sm:$0xff]
    %v73 = vld [vmem:[#allocation5 + $0xc8] sm:$0xff]
    %v74 = vld [vmem:[#allocation5 + $0xd8] sm:$0xff]
    %v75 = vld [vmem:[#allocation5 + $0xe0] sm:$0xff]
    %v76 = vld [vmem:[#allocation5 + $0xf0] sm:$0xff]
    %v77 = vld [vmem:[#allocation5 + $0xf8] sm:$0xff]
    %v78 = vld [vmem:[#allocation5 + $0x108] sm:$0xff]
    %v79 = vld [vmem:[#allocation5 + $0x110] sm:$0xff]
    %v80 = vld [vmem:[#allocation5 + $0x120] sm:$0xff]
    %v81 = vld [vmem:[#allocation5 + $0x128] sm:$0xff]
    %v82 = vld [vmem:[#allocation5 + $0x138] sm:$0xff]
    %v83 = vld [vmem:[#allocation5 + $0x140] sm:$0xff]
    %v84 = vld [vmem:[#allocation5 + $0x150] sm:$0xff]
    %v85 = vld [vmem:[#allocation5 + $0x158] sm:$0xff]
    %v86 = vld [vmem:[#allocation5 + $0x168] sm:$0xff]
    %v87 = vld [vmem:[#allocation5 + $0x170] sm:$0xff]
    %88 = vmatprep.subr.mxu0 %v87
    %89 = vmatpush1.msra.mxu0 %v86
    %90 = vmatprep.subr.mxu0 %v85
    %91 = vmatpush1.msra.mxu0 %v84
    %92 = vmatprep.subr.mxu0 %v83
    %93 = vmatpush1.msra.mxu0 %v82
    %94 = vmatprep.subr.mxu0 %v81
    %95 = vmatpush1.msra.mxu0 %v80
    %96 = vmatprep.subr.mxu0 %v79
    %97 = vmatpush1.msra.mxu0 %v78
    %98 = vmatprep.subr.mxu0 %v77
    %99 = vmatpush1.msra.mxu0 %v76
    %100 = vmatprep.subr.mxu0 %v75
    %101 = vmatpush1.msra.mxu0 %v74
    %102 = vmatprep.subr.mxu0 %v73
    %103 = vmatpush1.msra.mxu0 %v72
    %104 = vmatprep.subr.mxu0 %v71
    %105 = vmatpush1.msra.mxu0 %v70
    %106 = vmatprep.subr.mxu0 %v69
    %107 = vmatpush1.msra.mxu0 %v68
    %108 = vmatprep.subr.mxu0 %v67
    %109 = vmatpush1.msra.mxu0 %v66
    %110 = vmatprep.subr.mxu0 %v65
    %111 = vmatpush1.msra.mxu0 %v64
    %112 = vmatprep.subr.mxu0 %v63
    %113 = vmatpush1.msra.mxu0 %v62
    %114 = vmatprep.subr.mxu0 %v61
    %115 = vmatpush1.msra.mxu0 %v60
    %116 = vmatprep.subr.mxu0 %v59
    %117 = vmatpush1.msra.mxu0 %v58
    %118 = vmatprep.subr.mxu0 %v57
    %119 = vmatpush1.msra.mxu0 %v56
    %120 = vmatprep.subr.mxu0 0.0
    %121 = vmatpush2.msra.mxu0 0.0
    %122 = vmatprep.subr.mxu0 0.0
    %123 = vmatpush2.msra.mxu0 0.0
    %124 = vmatprep.subr.mxu0 0.0
    %125 = vmatpush2.msra.mxu0 0.0
    %126 = vmatprep.subr.mxu0 0.0
    %127 = vmatpush2.msra.mxu0 0.0
    %128 = vmatprep.subr.mxu0 0.0
    %129 = vmatpush2.msra.mxu0 0.0
    %130 = vmatprep.subr.mxu0 0.0
    %131 = vmatpush2.msra.mxu0 0.0
    %132 = vmatprep.subr.mxu0 0.0
    %133 = vmatpush2.msra.mxu0 0.0
    %134 = vmatprep.subr.mxu0 0.0
    %135 = vmatpush2.msra.mxu0 0.0
    %136 = vmatprep.subr.mxu0 0.0
    %137 = vmatpush2.msra.mxu0 0.0
    %138 = vmatprep.subr.mxu0 0.0
    %139 = vmatpush2.msra.mxu0 0.0
    %140 = vmatprep.subr.mxu0 0.0
    %141 = vmatpush2.msra.mxu0 0.0
    %142 = vmatprep.subr.mxu0 0.0
    %143 = vmatpush2.msra.mxu0 0.0
    %144 = vmatprep.subr.mxu0 0.0
    %145 = vmatpush2.msra.mxu0 0.0
    %146 = vmatprep.subr.mxu0 0.0
    %147 = vmatpush2.msra.mxu0 0.0
    %148 = vmatprep.subr.mxu0 0.0
    %149 = vmatpush2.msra.mxu0 0.0
    %150 = vmatprep.subr.mxu0 0.0
    %151 = vmatpush2.msra.mxu0 0.0
    %152 = vmatprep.mubr.f32.mxu0 0.0
    %153 = vmatmul.mubr.f32.gmra.mxu0 0.0
    %v154 = vpop.f32.mrf.mxu0
    %v155 = vadd.f32 0.0, %v154
    %v156 = vpop.f32.mrf.mxu0
    %v157 = vadd.f32 0.0, %v156
    %158 = vdwg.mxu0
    %v159 = vadd.f32 %v53, %v155
    %v160 = vxor.u32 %v159, 2147483648
    %v161 = vmul.f32 %v160, 1.442695
    %v162 = vpow.pop %v161
    %v163 = vadd.f32 %v162, 1.0
    %v164 = vrcp.pop %v163
    %v165 = vmul.f32 1.0, %v164
    %v166 = vadd.f32 %v54, %v157
    %v167 = vxor.u32 %v166, 2147483648
    %v168 = vmul.f32 %v167, 1.442695
    %v169 = vpow.pop %v168
    %v170 = vadd.f32 %v169, 1.0
    %v171 = vrcp.pop %v170
    %v172 = vmul.f32 1.0, %v171
    %v173 = vld [vmem:[#allocation5 + $0x10] sm:$0xff]
    %v174 = vld [vmem:[#allocation5 + $0x28] sm:$0xff]
    %v175 = vld [vmem:[#allocation5 + $0x40] sm:$0xff]
    %v176 = vld [vmem:[#allocation5 + $0x58] sm:$0xff]
    %v177 = vld [vmem:[#allocation5 + $0x70] sm:$0xff]
    %v178 = vld [vmem:[#allocation5 + $0x88] sm:$0xff]
    %v179 = vld [vmem:[#allocation5 + $0xa0] sm:$0xff]
    %v180 = vld [vmem:[#allocation5 + $0xb8] sm:$0xff]
    %v181 = vld [vmem:[#allocation5 + $0xd0] sm:$0xff]
    %v182 = vld [vmem:[#allocation5 + $0xe8] sm:$0xff]
    %v183 = vld [vmem:[#allocation5 + $0x100] sm:$0xff]
    %v184 = vld [vmem:[#allocation5 + $0x118] sm:$0xff]
    %v185 = vld [vmem:[#allocation5 + $0x130] sm:$0xff]
    %v186 = vld [vmem:[#allocation5 + $0x148] sm:$0xff]
    %v187 = vld [vmem:[#allocation5 + $0x160] sm:$0xff]
    %v188 = vld [vmem:[#allocation5 + $0x178] sm:$0xff]
    %189 = vmatprep.subr.mxu0 0.0
    %190 = vmatpush1.msra.mxu0 %v188
    %191 = vmatprep.subr.mxu0 0.0
    %192 = vmatpush1.msra.mxu0 %v187
    %193 = vmatprep.subr.mxu0 0.0
    %194 = vmatpush1.msra.mxu0 %v186
    %195 = vmatprep.subr.mxu0 0.0
    %196 = vmatpush1.msra.mxu0 %v185
    %197 = vmatprep.subr.mxu0 0.0
    %198 = vmatpush1.msra.mxu0 %v184
    %199 = vmatprep.subr.mxu0 0.0
    %200 = vmatpush1.msra.mxu0 %v183
    %201 = vmatprep.subr.mxu0 0.0
    %202 = vmatpush1.msra.mxu0 %v182
    %203 = vmatprep.subr.mxu0 0.0
    %204 = vmatpush1.msra.mxu0 %v181
    %205 = vmatprep.subr.mxu0 0.0
    %206 = vmatpush1.msra.mxu0 %v180
    %207 = vmatprep.subr.mxu0 0.0
    %208 = vmatpush1.msra.mxu0 %v179
    %209 = vmatprep.subr.mxu0 0.0
    %210 = vmatpush1.msra.mxu0 %v178
    %211 = vmatprep.subr.mxu0 0.0
    %212 = vmatpush1.msra.mxu0 %v177
    %213 = vmatprep.subr.mxu0 0.0
    %214 = vmatpush1.msra.mxu0 %v176
    %215 = vmatprep.subr.mxu0 0.0
    %216 = vmatpush1.msra.mxu0 %v175
    %217 = vmatprep.subr.mxu0 0.0
    %218 = vmatpush1.msra.mxu0 %v174
    %219 = vmatprep.subr.mxu0 0.0
    %220 = vmatpush1.msra.mxu0 %v173
    %221 = vmatprep.subr.mxu0 0.0
    %222 = vmatpush2.msra.mxu0 0.0
    %223 = vmatprep.subr.mxu0 0.0
    %224 = vmatpush2.msra.mxu0 0.0
    %225 = vmatprep.subr.mxu0 0.0
    %226 = vmatpush2.msra.mxu0 0.0
    %227 = vmatprep.subr.mxu0 0.0
    %228 = vmatpush2.msra.mxu0 0.0
    %229 = vmatprep.subr.mxu0 0.0
    %230 = vmatpush2.msra.mxu0 0.0
    %231 = vmatprep.subr.mxu0 0.0
    %232 = vmatpush2.msra.mxu0 0.0
    %233 = vmatprep.subr.mxu0 0.0
    %234 = vmatpush2.msra.mxu0 0.0
    %235 = vmatprep.subr.mxu0 0.0
    %236 = vmatpush2.msra.mxu0 0.0
    %237 = vmatprep.subr.mxu0 0.0
    %238 = vmatpush2.msra.mxu0 0.0
    %239 = vmatprep.subr.mxu0 0.0
    %240 = vmatpush2.msra.mxu0 0.0
    %241 = vmatprep.subr.mxu0 0.0
    %242 = vmatpush2.msra.mxu0 0.0
    %243 = vmatprep.subr.mxu0 0.0
    %244 = vmatpush2.msra.mxu0 0.0
    %245 = vmatprep.subr.mxu0 0.0
    %246 = vmatpush2.msra.mxu0 0.0
    %247 = vmatprep.subr.mxu0 0.0
    %248 = vmatpush2.msra.mxu0 0.0
    %249 = vmatprep.subr.mxu0 0.0
    %250 = vmatpush2.msra.mxu0 0.0
    %251 = vmatprep.subr.mxu0 0.0
    %252 = vmatpush2.msra.mxu0 0.0
    %253 = vmatprep.mubr.f32.mxu0 0.0
    %254 = vmatmul.mubr.f32.gmra.mxu0 0.0
    %v255 = vpop.f32.mrf.mxu0
    %v256 = vadd.f32 %v51, %v255
    %v257 = vpop.f32.mrf.mxu0
    %258 = vdwg.mxu0
    %v259 = vmul.f32 %v165, %v256
    %v260 = vadd.f32 %v55, %v259
    %v261 = vtanh.pop %v260
    %v262 = vsub.f32 0.0, %v261
    %v263 = vmul.f32 %v172, %v262
    %v264 = vadd.f32 %v261, %v263
    %265 = vst [vmem:[#allocation7] sm:$0xff] %v264
    %s266 = scalar_lea.vmem [#allocation2], 24
    %v267 = vld [vmem:[%s266] sm:$0xff]
    %v268 = vld [vmem:[%s266 + $0x8] sm:$0xff]
    %v269 = vld [vmem:[%s266 + $0x10] sm:$0xff]
    %v270 = vld [vmem:[#allocation5] sm:$0xff]
    %v271 = vld [vmem:[#allocation5 + $0x8] sm:$0xff]
    %v272 = vld [vmem:[#allocation5 + $0x18] sm:$0xff]
    %v273 = vld [vmem:[#allocation5 + $0x20] sm:$0xff]
    %v274 = vld [vmem:[#allocation5 + $0x30] sm:$0xff]
    %v275 = vld [vmem:[#allocation5 + $0x38] sm:$0xff]
    %v276 = vld [vmem:[#allocation5 + $0x48] sm:$0xff]
    %v277 = vld [vmem:[#allocation5 + $0x50] sm:$0xff]
    %v278 = vld [vmem:[#allocation5 + $0x60] sm:$0xff]
    %v279 = vld [vmem:[#allocation5 + $0x68] sm:$0xff]
    %v280 = vld [vmem:[#allocation5 + $0x78] sm:$0xff]
    %v281 = vld [vmem:[#allocation5 + $0x80] sm:$0xff]
    %v282 = vld [vmem:[#allocation5 + $0x90] sm:$0xff]
    %v283 = vld [vmem:[#allocation5 + $0x98] sm:$0xff]
    %v284 = vld [vmem:[#allocation5 + $0xa8] sm:$0xff]
    %v285 = vld [vmem:[#allocation5 + $0xb0] sm:$0xff]
    %v286 = vld [vmem:[#allocation5 + $0xc0] sm:$0xff]
    %v287 = vld [vmem:[#allocation5 + $0xc8] sm:$0xff]
    %v288 = vld [vmem:[#allocation5 + $0xd8] sm:$0xff]
    %v289 = vld [vmem:[#allocation5 + $0xe0] sm:$0xff]
    %v290 = vld [vmem:[#allocation5 + $0xf0] sm:$0xff]
    %v291 = vld [vmem:[#allocation5 + $0xf8] sm:$0xff]
    %v292 = vld [vmem:[#allocation5 + $0x108] sm:$0xff]
    %v293 = vld [vmem:[#allocation5 + $0x110] sm:$0xff]
    %v294 = vld [vmem:[#allocation5 + $0x120] sm:$0xff]
    %v295 = vld [vmem:[#allocation5 + $0x128] sm:$0xff]
    %v296 = vld [vmem:[#allocation5 + $0x138] sm:$0xff]
    %v297 = vld [vmem:[#allocation5 + $0x140] sm:$0xff]
    %v298 = vld [vmem:[#allocation5 + $0x150] sm:$0xff]
    %v299 = vld [vmem:[#allocation5 + $0x158] sm:$0xff]
    %v300 = vld [vmem:[#allocation5 + $0x168] sm:$0xff]
    %v301 = vld [vmem:[#allocation5 + $0x170] sm:$0xff]
    %302 = vmatprep.subr.mxu0 %v301
    %303 = vmatpush1.msra.mxu0 %v300
    %304 = vmatprep.subr.mxu0 %v299
    %305 = vmatpush1.msra.mxu0 %v298
    %306 = vmatprep.subr.mxu0 %v297
    %307 = vmatpush1.msra.mxu0 %v296
    %308 = vmatprep.subr.mxu0 %v295
    %309 = vmatpush1.msra.mxu0 %v294
    %310 = vmatprep.subr.mxu0 %v293
    %311 = vmatpush1.msra.mxu0 %v292
    %312 = vmatprep.subr.mxu0 %v291
    %313 = vmatpush1.msra.mxu0 %v290
    %314 = vmatprep.subr.mxu0 %v289
    %315 = vmatpush1.msra.mxu0 %v288
    %316 = vmatprep.subr.mxu0 %v287
    %317 = vmatpush1.msra.mxu0 %v286
    %318 = vmatprep.subr.mxu0 %v285
    %319 = vmatpush1.msra.mxu0 %v284
    %320 = vmatprep.subr.mxu0 %v283
    %321 = vmatpush1.msra.mxu0 %v282
    %322 = vmatprep.subr.mxu0 %v281
    %323 = vmatpush1.msra.mxu0 %v280
    %324 = vmatprep.subr.mxu0 %v279
    %325 = vmatpush1.msra.mxu0 %v278
    %326 = vmatprep.subr.mxu0 %v277
    %327 = vmatpush1.msra.mxu0 %v276
    %328 = vmatprep.subr.mxu0 %v275
    %329 = vmatpush1.msra.mxu0 %v274
    %330 = vmatprep.subr.mxu0 %v273
    %331 = vmatpush1.msra.mxu0 %v272
    %332 = vmatprep.subr.mxu0 %v271
    %333 = vmatpush1.msra.mxu0 %v270
    %334 = vmatprep.subr.mxu0 0.0
    %335 = vmatpush2.msra.mxu0 0.0
    %336 = vmatprep.subr.mxu0 0.0
    %337 = vmatpush2.msra.mxu0 0.0
    %338 = vmatprep.subr.mxu0 0.0
    %339 = vmatpush2.msra.mxu0 0.0
    %340 = vmatprep.subr.mxu0 0.0
    %341 = vmatpush2.msra.mxu0 0.0
    %342 = vmatprep.subr.mxu0 0.0
    %343 = vmatpush2.msra.mxu0 0.0
    %344 = vmatprep.subr.mxu0 0.0
    %345 = vmatpush2.msra.mxu0 0.0
    %346 = vmatprep.subr.mxu0 0.0
    %347 = vmatpush2.msra.mxu0 0.0
    %348 = vmatprep.subr.mxu0 0.0
    %349 = vmatpush2.msra.mxu0 0.0
    %350 = vmatprep.subr.mxu0 0.0
    %351 = vmatpush2.msra.mxu0 0.0
    %352 = vmatprep.subr.mxu0 0.0
    %353 = vmatpush2.msra.mxu0 0.0
    %354 = vmatprep.subr.mxu0 0.0
    %355 = vmatpush2.msra.mxu0 0.0
    %356 = vmatprep.subr.mxu0 0.0
    %357 = vmatpush2.msra.mxu0 0.0
    %358 = vmatprep.subr.mxu0 0.0
    %359 = vmatpush2.msra.mxu0 0.0
    %360 = vmatprep.subr.mxu0 0.0
    %361 = vmatpush2.msra.mxu0 0.0
    %362 = vmatprep.subr.mxu0 0.0
    %363 = vmatpush2.msra.mxu0 0.0
    %364 = vmatprep.subr.mxu0 0.0
    %365 = vmatpush2.msra.mxu0 0.0
    %366 = vmatprep.mubr.f32.mxu0 0.0
    %367 = vmatmul.mubr.f32.gmra.mxu0 %v264
    %v368 = vpop.f32.mrf.mxu0
    %v369 = vadd.f32 0.0, %v368
    %v370 = vpop.f32.mrf.mxu0
    %v371 = vadd.f32 0.0, %v370
    %372 = vdwg.mxu0
    %v373 = vadd.f32 %v267, %v369
    %v374 = vxor.u32 %v373, 2147483648
    %v375 = vmul.f32 %v374, 1.442695
    %v376 = vpow.pop %v375
    %v377 = vadd.f32 %v376, 1.0
    %v378 = vrcp.pop %v377
    %v379 = vmul.f32 1.0, %v378
    %v380 = vadd.f32 %v268, %v371
    %v381 = vxor.u32 %v380, 2147483648
    %v382 = vmul.f32 %v381, 1.442695
    %v383 = vpow.pop %v382
    %v384 = vadd.f32 %v383, 1.0
    %v385 = vrcp.pop %v384
    %v386 = vmul.f32 1.0, %v385
    %v387 = vld [vmem:[#allocation5 + $0x10] sm:$0xff]
    %v388 = vld [vmem:[#allocation5 + $0x28] sm:$0xff]
    %v389 = vld [vmem:[#allocation5 + $0x40] sm:$0xff]
    %v390 = vld [vmem:[#allocation5 + $0x58] sm:$0xff]
    %v391 = vld [vmem:[#allocation5 + $0x70] sm:$0xff]
    %v392 = vld [vmem:[#allocation5 + $0x88] sm:$0xff]
    %v393 = vld [vmem:[#allocation5 + $0xa0] sm:$0xff]
    %v394 = vld [vmem:[#allocation5 + $0xb8] sm:$0xff]
    %v395 = vld [vmem:[#allocation5 + $0xd0] sm:$0xff]
    %v396 = vld [vmem:[#allocation5 + $0xe8] sm:$0xff]
    %v397 = vld [vmem:[#allocation5 + $0x100] sm:$0xff]
    %v398 = vld [vmem:[#allocation5 + $0x118] sm:$0xff]
    %v399 = vld [vmem:[#allocation5 + $0x130] sm:$0xff]
    %v400 = vld [vmem:[#allocation5 + $0x148] sm:$0xff]
    %v401 = vld [vmem:[#allocation5 + $0x160] sm:$0xff]
    %v402 = vld [vmem:[#allocation5 + $0x178] sm:$0xff]
    %403 = vmatprep.subr.mxu0 0.0
    %404 = vmatpush1.msra.mxu0 %v402
    %405 = vmatprep.subr.mxu0 0.0
    %406 = vmatpush1.msra.mxu0 %v401
    %407 = vmatprep.subr.mxu0 0.0
    %408 = vmatpush1.msra.mxu0 %v400
    %409 = vmatprep.subr.mxu0 0.0
    %410 = vmatpush1.msra.mxu0 %v399
    %411 = vmatprep.subr.mxu0 0.0
    %412 = vmatpush1.msra.mxu0 %v398
    %413 = vmatprep.subr.mxu0 0.0
    %414 = vmatpush1.msra.mxu0 %v397
    %415 = vmatprep.subr.mxu0 0.0
    %416 = vmatpush1.msra.mxu0 %v396
    %417 = vmatprep.subr.mxu0 0.0
    %418 = vmatpush1.msra.mxu0 %v395
    %419 = vmatprep.subr.mxu0 0.0
    %420 = vmatpush1.msra.mxu0 %v394
    %421 = vmatprep.subr.mxu0 0.0
    %422 = vmatpush1.msra.mxu0 %v393
    %423 = vmatprep.subr.mxu0 0.0
    %424 = vmatpush1.msra.mxu0 %v392
    %425 = vmatprep.subr.mxu0 0.0
    %426 = vmatpush1.msra.mxu0 %v391
    %427 = vmatprep.subr.mxu0 0.0
    %428 = vmatpush1.msra.mxu0 %v390
    %429 = vmatprep.subr.mxu0 0.0
    %430 = vmatpush1.msra.mxu0 %v389
    %431 = vmatprep.subr.mxu0 0.0
    %432 = vmatpush1.msra.mxu0 %v388
    %433 = vmatprep.subr.mxu0 0.0
    %434 = vmatpush1.msra.mxu0 %v387
    %435 = vmatprep.subr.mxu0 0.0
    %436 = vmatpush2.msra.mxu0 0.0
    %437 = vmatprep.subr.mxu0 0.0
    %438 = vmatpush2.msra.mxu0 0.0
    %439 = vmatprep.subr.mxu0 0.0
    %440 = vmatpush2.msra.mxu0 0.0
    %441 = vmatprep.subr.mxu0 0.0
    %442 = vmatpush2.msra.mxu0 0.0
    %443 = vmatprep.subr.mxu0 0.0
    %444 = vmatpush2.msra.mxu0 0.0
    %445 = vmatprep.subr.mxu0 0.0
    %446 = vmatpush2.msra.mxu0 0.0
    %447 = vmatprep.subr.mxu0 0.0
    %448 = vmatpush2.msra.mxu0 0.0
    %449 = vmatprep.subr.mxu0 0.0
    %450 = vmatpush2.msra.mxu0 0.0
    %451 = vmatprep.subr.mxu0 0.0
    %452 = vmatpush2.msra.mxu0 0.0
    %453 = vmatprep.subr.mxu0 0.0
    %454 = vmatpush2.msra.mxu0 0.0
    %455 = vmatprep.subr.mxu0 0.0
    %456 = vmatpush2.msra.mxu0 0.0
    %457 = vmatprep.subr.mxu0 0.0
    %458 = vmatpush2.msra.mxu0 0.0
    %459 = vmatprep.subr.mxu0 0.0
    %460 = vmatpush2.msra.mxu0 0.0
    %461 = vmatprep.subr.mxu0 0.0
    %462 = vmatpush2.msra.mxu0 0.0
    %463 = vmatprep.subr.mxu0 0.0
    %464 = vmatpush2.msra.mxu0 0.0
    %465 = vmatprep.subr.mxu0 0.0
    %466 = vmatpush2.msra.mxu0 0.0
    %467 = vmatprep.mubr.f32.mxu0 0.0
    %468 = vmatmul.mubr.f32.gmra.mxu0 %v264
    %v469 = vpop.f32.mrf.mxu0
    %v470 = vadd.f32 %v51, %v469
    %v471 = vpop.f32.mrf.mxu0
    %472 = vdwg.mxu0
    %v473 = vmul.f32 %v379, %v470
    %v474 = vadd.f32 %v269, %v473
    %v475 = vtanh.pop %v474
    %v476 = vsub.f32 %v264, %v475
    %v477 = vmul.f32 %v386, %v476
    %v478 = vadd.f32 %v475, %v477
    %s479 = scalar_lea.vmem [#allocation7], 8
    %480 = vst [vmem:[%s479] sm:$0xff] %v478
    %s481 = scalar_lea.vmem [#allocation2], 48
    %v482 = vld [vmem:[%s481] sm:$0xff]
    %v483 = vld [vmem:[%s481 + $0x8] sm:$0xff]
    %v484 = vld [vmem:[%s481 + $0x10] sm:$0xff]
    %v485 = vld [vmem:[#allocation5] sm:$0xff]
    %v486 = vld [vmem:[#allocation5 + $0x8] sm:$0xff]
    %v487 = vld [vmem:[#allocation5 + $0x18] sm:$0xff]
    %v488 = vld [vmem:[#allocation5 + $0x20] sm:$0xff]
    %v489 = vld [vmem:[#allocation5 + $0x30] sm:$0xff]
    %v490 = vld [vmem:[#allocation5 + $0x38] sm:$0xff]
    %v491 = vld [vmem:[#allocation5 + $0x48] sm:$0xff]
    %v492 = vld [vmem:[#allocation5 + $0x50] sm:$0xff]
    %v493 = vld [vmem:[#allocation5 + $0x60] sm:$0xff]
    %v494 = vld [vmem:[#allocation5 + $0x68] sm:$0xff]
    %v495 = vld [vmem:[#allocation5 + $0x78] sm:$0xff]
    %v496 = vld [vmem:[#allocation5 + $0x80] sm:$0xff]
    %v497 = vld [vmem:[#allocation5 + $0x90] sm:$0xff]
    %v498 = vld [vmem:[#allocation5 + $0x98] sm:$0xff]
    %v499 = vld [vmem:[#allocation5 + $0xa8] sm:$0xff]
    %v500 = vld [vmem:[#allocation5 + $0xb0] sm:$0xff]
    %v501 = vld [vmem:[#allocation5 + $0xc0] sm:$0xff]
    %v502 = vld [vmem:[#allocation5 + $0xc8] sm:$0xff]
    %v503 = vld [vmem:[#allocation5 + $0xd8] sm:$0xff]
    %v504 = vld [vmem:[#allocation5 + $0xe0] sm:$0xff]
    %v505 = vld [vmem:[#allocation5 + $0xf0] sm:$0xff]
    %v506 = vld [vmem:[#allocation5 + $0xf8] sm:$0xff]
    %v507 = vld [vmem:[#allocation5 + $0x108] sm:$0xff]
    %v508 = vld [vmem:[#allocation5 + $0x110] sm:$0xff]
    %v509 = vld [vmem:[#allocation5 + $0x120] sm:$0xff]
    %v510 = vld [vmem:[#allocation5 + $0x128] sm:$0xff]
    %v511 = vld [vmem:[#allocation5 + $0x138] sm:$0xff]
    %v512 = vld [vmem:[#allocation5 + $0x140] sm:$0xff]
    %v513 = vld [vmem:[#allocation5 + $0x150] sm:$0xff]
    %v514 = vld [vmem:[#allocation5 + $0x158] sm:$0xff]
    %v515 = vld [vmem:[#allocation5 + $0x168] sm:$0xff]
    %v516 = vld [vmem:[#allocation5 + $0x170] sm:$0xff]
    %517 = vmatprep.subr.mxu0 %v516
    %518 = vmatpush1.msra.mxu0 %v515
    %519 = vmatprep.subr.mxu0 %v514
    %520 = vmatpush1.msra.mxu0 %v513
    %521 = vmatprep.subr.mxu0 %v512
    %522 = vmatpush1.msra.mxu0 %v511
    %523 = vmatprep.subr.mxu0 %v510
    %524 = vmatpush1.msra.mxu0 %v509
    %525 = vmatprep.subr.mxu0 %v508
    %526 = vmatpush1.msra.mxu0 %v507
    %527 = vmatprep.subr.mxu0 %v506
    %528 = vmatpush1.msra.mxu0 %v505
    %529 = vmatprep.subr.mxu0 %v504
    %530 = vmatpush1.msra.mxu0 %v503
    %531 = vmatprep.subr.mxu0 %v502
    %532 = vmatpush1.msra.mxu0 %v501
    %533 = vmatprep.subr.mxu0 %v500
    %534 = vmatpush1.msra.mxu0 %v499
    %535 = vmatprep.subr.mxu0 %v498
    %536 = vmatpush1.msra.mxu0 %v497
    %537 = vmatprep.subr.mxu0 %v496
    %538 = vmatpush1.msra.mxu0 %v495
    %539 = vmatprep.subr.mxu0 %v494
    %540 = vmatpush1.msra.mxu0 %v493
    %541 = vmatprep.subr.mxu0 %v492
    %542 = vmatpush1.msra.mxu0 %v491
    %543 = vmatprep.subr.mxu0 %v490
    %544 = vmatpush1.msra.mxu0 %v489
    %545 = vmatprep.subr.mxu0 %v488
    %546 = vmatpush1.msra.mxu0 %v487
    %547 = vmatprep.subr.mxu0 %v486
    %548 = vmatpush1.msra.mxu0 %v485
    %549 = vmatprep.subr.mxu0 0.0
    %550 = vmatpush2.msra.mxu0 0.0
    %551 = vmatprep.subr.mxu0 0.0
    %552 = vmatpush2.msra.mxu0 0.0
    %553 = vmatprep.subr.mxu0 0.0
    %554 = vmatpush2.msra.mxu0 0.0
    %555 = vmatprep.subr.mxu0 0.0
    %556 = vmatpush2.msra.mxu0 0.0
    %557 = vmatprep.subr.mxu0 0.0
    %558 = vmatpush2.msra.mxu0 0.0
    %559 = vmatprep.subr.mxu0 0.0
    %560 = vmatpush2.msra.mxu0 0.0
    %561 = vmatprep.subr.mxu0 0.0
    %562 = vmatpush2.msra.mxu0 0.0
    %563 = vmatprep.subr.mxu0 0.0
    %564 = vmatpush2.msra.mxu0 0.0
    %565 = vmatprep.subr.mxu0 0.0
    %566 = vmatpush2.msra.mxu0 0.0
    %567 = vmatprep.subr.mxu0 0.0
    %568 = vmatpush2.msra.mxu0 0.0
    %569 = vmatprep.subr.mxu0 0.0
    %570 = vmatpush2.msra.mxu0 0.0
    %571 = vmatprep.subr.mxu0 0.0
    %572 = vmatpush2.msra.mxu0 0.0
    %573 = vmatprep.subr.mxu0 0.0
    %574 = vmatpush2.msra.mxu0 0.0
    %575 = vmatprep.subr.mxu0 0.0
    %576 = vmatpush2.msra.mxu0 0.0
    %577 = vmatprep.subr.mxu0 0.0
    %578 = vmatpush2.msra.mxu0 0.0
    %579 = vmatprep.subr.mxu0 0.0
    %580 = vmatpush2.msra.mxu0 0.0
    %581 = vmatprep.mubr.f32.mxu0 0.0
    %582 = vmatmul.mubr.f32.gmra.mxu0 %v478
    %v583 = vpop.f32.mrf.mxu0
    %v584 = vadd.f32 0.0, %v583
    %v585 = vpop.f32.mrf.mxu0
    %v586 = vadd.f32 0.0, %v585
    %587 = vdwg.mxu0
    %v588 = vadd.f32 %v482, %v584
    %v589 = vxor.u32 %v588, 2147483648
    %v590 = vmul.f32 %v589, 1.442695
    %v591 = vpow.pop %v590
    %v592 = vadd.f32 %v591, 1.0
    %v593 = vrcp.pop %v592
    %v594 = vmul.f32 1.0, %v593
    %v595 = vadd.f32 %v483, %v586
    %v596 = vxor.u32 %v595, 2147483648
    %v597 = vmul.f32 %v596, 1.442695
    %v598 = vpow.pop %v597
    %v599 = vadd.f32 %v598, 1.0
    %v600 = vrcp.pop %v599
    %v601 = vmul.f32 1.0, %v600
    %v602 = vld [vmem:[#allocation5 + $0x10] sm:$0xff]
    %v603 = vld [vmem:[#allocation5 + $0x28] sm:$0xff]
    %v604 = vld [vmem:[#allocation5 + $0x40] sm:$0xff]
    %v605 = vld [vmem:[#allocation5 + $0x58] sm:$0xff]
    %v606 = vld [vmem:[#allocation5 + $0x70] sm:$0xff]
    %v607 = vld [vmem:[#allocation5 + $0x88] sm:$0xff]
    %v608 = vld [vmem:[#allocation5 + $0xa0] sm:$0xff]
    %v609 = vld [vmem:[#allocation5 + $0xb8] sm:$0xff]
    %v610 = vld [vmem:[#allocation5 + $0xd0] sm:$0xff]
    %v611 = vld [vmem:[#allocation5 + $0xe8] sm:$0xff]
    %v612 = vld [vmem:[#allocation5 + $0x100] sm:$0xff]
    %v613 = vld [vmem:[#allocation5 + $0x118] sm:$0xff]
    %v614 = vld [vmem:[#allocation5 + $0x130] sm:$0xff]
    %v615 = vld [vmem:[#allocation5 + $0x148] sm:$0xff]
    %v616 = vld [vmem:[#allocation5 + $0x160] sm:$0xff]
    %v617 = vld [vmem:[#allocation5 + $0x178] sm:$0xff]
    %618 = vmatprep.subr.mxu0 0.0
    %619 = vmatpush1.msra.mxu0 %v617
    %620 = vmatprep.subr.mxu0 0.0
    %621 = vmatpush1.msra.mxu0 %v616
    %622 = vmatprep.subr.mxu0 0.0
    %623 = vmatpush1.msra.mxu0 %v615
    %624 = vmatprep.subr.mxu0 0.0
    %625 = vmatpush1.msra.mxu0 %v614
    %626 = vmatprep.subr.mxu0 0.0
    %627 = vmatpush1.msra.mxu0 %v613
    %628 = vmatprep.subr.mxu0 0.0
    %629 = vmatpush1.msra.mxu0 %v612
    %630 = vmatprep.subr.mxu0 0.0
    %631 = vmatpush1.msra.mxu0 %v611
    %632 = vmatprep.subr.mxu0 0.0
    %633 = vmatpush1.msra.mxu0 %v610
    %634 = vmatprep.subr.mxu0 0.0
    %635 = vmatpush1.msra.mxu0 %v609
    %636 = vmatprep.subr.mxu0 0.0
    %637 = vmatpush1.msra.mxu0 %v608
    %638 = vmatprep.subr.mxu0 0.0
    %639 = vmatpush1.msra.mxu0 %v607
    %640 = vmatprep.subr.mxu0 0.0
    %641 = vmatpush1.msra.mxu0 %v606
    %642 = vmatprep.subr.mxu0 0.0
    %643 = vmatpush1.msra.mxu0 %v605
    %644 = vmatprep.subr.mxu0 0.0
    %645 = vmatpush1.msra.mxu0 %v604
    %646 = vmatprep.subr.mxu0 0.0
    %647 = vmatpush1.msra.mxu0 %v603
    %648 = vmatprep.subr.mxu0 0.0
    %649 = vmatpush1.msra.mxu0 %v602
    %650 = vmatprep.subr.mxu0 0.0
    %651 = vmatpush2.msra.mxu0 0.0
    %652 = vmatprep.subr.mxu0 0.0
    %653 = vmatpush2.msra.mxu0 0.0
    %654 = vmatprep.subr.mxu0 0.0
    %655 = vmatpush2.msra.mxu0 0.0
    %656 = vmatprep.subr.mxu0 0.0
    %657 = vmatpush2.msra.mxu0 0.0
    %658 = vmatprep.subr.mxu0 0.0
    %659 = vmatpush2.msra.mxu0 0.0
    %660 = vmatprep.subr.mxu0 0.0
    %661 = vmatpush2.msra.mxu0 0.0
    %662 = vmatprep.subr.mxu0 0.0
    %663 = vmatpush2.msra.mxu0 0.0
    %664 = vmatprep.subr.mxu0 0.0
    %665 = vmatpush2.msra.mxu0 0.0
    %666 = vmatprep.subr.mxu0 0.0
    %667 = vmatpush2.msra.mxu0 0.0
    %668 = vmatprep.subr.mxu0 0.0
    %669 = vmatpush2.msra.mxu0 0.0
    %670 = vmatprep.subr.mxu0 0.0
    %671 = vmatpush2.msra.mxu0 0.0
    %672 = vmatprep.subr.mxu0 0.0
    %673 = vmatpush2.msra.mxu0 0.0
    %674 = vmatprep.subr.mxu0 0.0
    %675 = vmatpush2.msra.mxu0 0.0
    %676 = vmatprep.subr.mxu0 0.0
    %677 = vmatpush2.msra.mxu0 0.0
    %678 = vmatprep.subr.mxu0 0.0
    %679 = vmatpush2.msra.mxu0 0.0
    %680 = vmatprep.subr.mxu0 0.0
    %681 = vmatpush2.msra.mxu0 0.0
    %682 = vmatprep.mubr.f32.mxu0 0.0
    %683 = vmatmul.mubr.f32.gmra.mxu0 %v478
    %v684 = vpop.f32.mrf.mxu0
    %v685 = vadd.f32 %v51, %v684
    %v686 = vpop.f32.mrf.mxu0
    %687 = vdwg.mxu0
    %v688 = vmul.f32 %v594, %v685
    %v689 = vadd.f32 %v484, %v688
    %v690 = vtanh.pop %v689
    %v691 = vsub.f32 %v478, %v690
    %v692 = vmul.f32 %v601, %v691
    %v693 = vadd.f32 %v690, %v692
    %s694 = scalar_lea.vmem [#allocation7], 16
    %695 = vst [vmem:[%s694] sm:$0xff] %v693
    %s696 = scalar_lea.vmem [#allocation2], 72
    %v697 = vld [vmem:[%s696] sm:$0xff]
    %v698 = vld [vmem:[%s696 + $0x8] sm:$0xff]
    %v699 = vld [vmem:[%s696 + $0x10] sm:$0xff]
    %v700 = vld [vmem:[#allocation5] sm:$0xff]
    %v701 = vld [vmem:[#allocation5 + $0x8] sm:$0xff]
    %v702 = vld [vmem:[#allocation5 + $0x18] sm:$0xff]
    %v703 = vld [vmem:[#allocation5 + $0x20] sm:$0xff]
    %v704 = vld [vmem:[#allocation5 + $0x30] sm:$0xff]
    %v705 = vld [vmem:[#allocation5 + $0x38] sm:$0xff]
    %v706 = vld [vmem:[#allocation5 + $0x48] sm:$0xff]
    %v707 = vld [vmem:[#allocation5 + $0x50] sm:$0xff]
    %v708 = vld [vmem:[#allocation5 + $0x60] sm:$0xff]
    %v709 = vld [vmem:[#allocation5 + $0x68] sm:$0xff]
    %v710 = vld [vmem:[#allocation5 + $0x78] sm:$0xff]
    %v711 = vld [vmem:[#allocation5 + $0x80] sm:$0xff]
    %v712 = vld [vmem:[#allocation5 + $0x90] sm:$0xff]
    %v713 = vld [vmem:[#allocation5 + $0x98] sm:$0xff]
    %v714 = vld [vmem:[#allocation5 + $0xa8] sm:$0xff]
    %v715 = vld [vmem:[#allocation5 + $0xb0] sm:$0xff]
    %v716 = vld [vmem:[#allocation5 + $0xc0] sm:$0xff]
    %v717 = vld [vmem:[#allocation5 + $0xc8] sm:$0xff]
    %v718 = vld [vmem:[#allocation5 + $0xd8] sm:$0xff]
    %v719 = vld [vmem:[#allocation5 + $0xe0] sm:$0xff]
    %v720 = vld [vmem:[#allocation5 + $0xf0] sm:$0xff]
    %v721 = vld [vmem:[#allocation5 + $0xf8] sm:$0xff]
    %v722 = vld [vmem:[#allocation5 + $0x108] sm:$0xff]
    %v723 = vld [vmem:[#allocation5 + $0x110] sm:$0xff]
    %v724 = vld [vmem:[#allocation5 + $0x120] sm:$0xff]
    %v725 = vld [vmem:[#allocation5 + $0x128] sm:$0xff]
    %v726 = vld [vmem:[#allocation5 + $0x138] sm:$0xff]
    %v727 = vld [vmem:[#allocation5 + $0x140] sm:$0xff]
    %v728 = vld [vmem:[#allocation5 + $0x150] sm:$0xff]
    %v729 = vld [vmem:[#allocation5 + $0x158] sm:$0xff]
    %v730 = vld [vmem:[#allocation5 + $0x168] sm:$0xff]
    %v731 = vld [vmem:[#allocation5 + $0x170] sm:$0xff]
    %732 = vmatprep.subr.mxu0 %v731
    %733 = vmatpush1.msra.mxu0 %v730
    %734 = vmatprep.subr.mxu0 %v729
    %735 = vmatpush1.msra.mxu0 %v728
    %736 = vmatprep.subr.mxu0 %v727
    %737 = vmatpush1.msra.mxu0 %v726
    %738 = vmatprep.subr.mxu0 %v725
    %739 = vmatpush1.msra.mxu0 %v724
    %740 = vmatprep.subr.mxu0 %v723
    %741 = vmatpush1.msra.mxu0 %v722
    %742 = vmatprep.subr.mxu0 %v721
    %743 = vmatpush1.msra.mxu0 %v720
    %744 = vmatprep.subr.mxu0 %v719
    %745 = vmatpush1.msra.mxu0 %v718
    %746 = vmatprep.subr.mxu0 %v717
    %747 = vmatpush1.msra.mxu0 %v716
    %748 = vmatprep.subr.mxu0 %v715
    %749 = vmatpush1.msra.mxu0 %v714
    %750 = vmatprep.subr.mxu0 %v713
    %751 = vmatpush1.msra.mxu0 %v712
    %752 = vmatprep.subr.mxu0 %v711
    %753 = vmatpush1.msra.mxu0 %v710
    %754 = vmatprep.subr.mxu0 %v709
    %755 = vmatpush1.msra.mxu0 %v708
    %756 = vmatprep.subr.mxu0 %v707
    %757 = vmatpush1.msra.mxu0 %v706
    %758 = vmatprep.subr.mxu0 %v705
    %759 = vmatpush1.msra.mxu0 %v704
    %760 = vmatprep.subr.mxu0 %v703
    %761 = vmatpush1.msra.mxu0 %v702
    %762 = vmatprep.subr.mxu0 %v701
    %763 = vmatpush1.msra.mxu0 %v700
    %764 = vmatprep.subr.mxu0 0.0
    %765 = vmatpush2.msra.mxu0 0.0
    %766 = vmatprep.subr.mxu0 0.0
    %767 = vmatpush2.msra.mxu0 0.0
    %768 = vmatprep.subr.mxu0 0.0
    %769 = vmatpush2.msra.mxu0 0.0
    %770 = vmatprep.subr.mxu0 0.0
    %771 = vmatpush2.msra.mxu0 0.0
    %772 = vmatprep.subr.mxu0 0.0
    %773 = vmatpush2.msra.mxu0 0.0
    %774 = vmatprep.subr.mxu0 0.0
    %775 = vmatpush2.msra.mxu0 0.0
    %776 = vmatprep.subr.mxu0 0.0
    %777 = vmatpush2.msra.mxu0 0.0
    %778 = vmatprep.subr.mxu0 0.0
    %779 = vmatpush2.msra.mxu0 0.0
    %780 = vmatprep.subr.mxu0 0.0
    %781 = vmatpush2.msra.mxu0 0.0
    %782 = vmatprep.subr.mxu0 0.0
    %783 = vmatpush2.msra.mxu0 0.0
    %784 = vmatprep.subr.mxu0 0.0
    %785 = vmatpush2.msra.mxu0 0.0
    %786 = vmatprep.subr.mxu0 0.0
    %787 = vmatpush2.msra.mxu0 0.0
    %788 = vmatprep.subr.mxu0 0.0
    %789 = vmatpush2.msra.mxu0 0.0
    %790 = vmatprep.subr.mxu0 0.0
    %791 = vmatpush2.msra.mxu0 0.0
    %792 = vmatprep.subr.mxu0 0.0
    %793 = vmatpush2.msra.mxu0 0.0
    %794 = vmatprep.subr.mxu0 0.0
    %795 = vmatpush2.msra.mxu0 0.0
    %796 = vmatprep.mubr.f32.mxu0 0.0
    %797 = vmatmul.mubr.f32.gmra.mxu0 %v693
    %v798 = vpop.f32.mrf.mxu0
    %v799 = vadd.f32 0.0, %v798
    %v800 = vpop.f32.mrf.mxu0
    %v801 = vadd.f32 0.0, %v800
    %802 = vdwg.mxu0
    %v803 = vadd.f32 %v697, %v799
    %v804 = vxor.u32 %v803, 2147483648
    %v805 = vmul.f32 %v804, 1.442695
    %v806 = vpow.pop %v805
    %v807 = vadd.f32 %v806, 1.0
    %v808 = vrcp.pop %v807
    %v809 = vmul.f32 1.0, %v808
    %v810 = vadd.f32 %v698, %v801
    %v811 = vxor.u32 %v810, 2147483648
    %v812 = vmul.f32 %v811, 1.442695
    %v813 = vpow.pop %v812
    %v814 = vadd.f32 %v813, 1.0
    %v815 = vrcp.pop %v814
    %v816 = vmul.f32 1.0, %v815
    %v817 = vld [vmem:[#allocation5 + $0x10] sm:$0xff]
    %v818 = vld [vmem:[#allocation5 + $0x28] sm:$0xff]
    %v819 = vld [vmem:[#allocation5 + $0x40] sm:$0xff]
    %v820 = vld [vmem:[#allocation5 + $0x58] sm:$0xff]
    %v821 = vld [vmem:[#allocation5 + $0x70] sm:$0xff]
    %v822 = vld [vmem:[#allocation5 + $0x88] sm:$0xff]
    %v823 = vld [vmem:[#allocation5 + $0xa0] sm:$0xff]
    %v824 = vld [vmem:[#allocation5 + $0xb8] sm:$0xff]
    %v825 = vld [vmem:[#allocation5 + $0xd0] sm:$0xff]
    %v826 = vld [vmem:[#allocation5 + $0xe8] sm:$0xff]
    %v827 = vld [vmem:[#allocation5 + $0x100] sm:$0xff]
    %v828 = vld [vmem:[#allocation5 + $0x118] sm:$0xff]
    %v829 = vld [vmem:[#allocation5 + $0x130] sm:$0xff]
    %v830 = vld [vmem:[#allocation5 + $0x148] sm:$0xff]
    %v831 = vld [vmem:[#allocation5 + $0x160] sm:$0xff]
    %v832 = vld [vmem:[#allocation5 + $0x178] sm:$0xff]
    %833 = vmatprep.subr.mxu0 0.0
    %834 = vmatpush1.msra.mxu0 %v832
    %835 = vmatprep.subr.mxu0 0.0
    %836 = vmatpush1.msra.mxu0 %v831
    %837 = vmatprep.subr.mxu0 0.0
    %838 = vmatpush1.msra.mxu0 %v830
    %839 = vmatprep.subr.mxu0 0.0
    %840 = vmatpush1.msra.mxu0 %v829
    %841 = vmatprep.subr.mxu0 0.0
    %842 = vmatpush1.msra.mxu0 %v828
    %843 = vmatprep.subr.mxu0 0.0
    %844 = vmatpush1.msra.mxu0 %v827
    %845 = vmatprep.subr.mxu0 0.0
    %846 = vmatpush1.msra.mxu0 %v826
    %847 = vmatprep.subr.mxu0 0.0
    %848 = vmatpush1.msra.mxu0 %v825
    %849 = vmatprep.subr.mxu0 0.0
    %850 = vmatpush1.msra.mxu0 %v824
    %851 = vmatprep.subr.mxu0 0.0
    %852 = vmatpush1.msra.mxu0 %v823
    %853 = vmatprep.subr.mxu0 0.0
    %854 = vmatpush1.msra.mxu0 %v822
    %855 = vmatprep.subr.mxu0 0.0
    %856 = vmatpush1.msra.mxu0 %v821
    %857 = vmatprep.subr.mxu0 0.0
    %858 = vmatpush1.msra.mxu0 %v820
    %859 = vmatprep.subr.mxu0 0.0
    %860 = vmatpush1.msra.mxu0 %v819
    %861 = vmatprep.subr.mxu0 0.0
    %862 = vmatpush1.msra.mxu0 %v818
    %863 = vmatprep.subr.mxu0 0.0
    %864 = vmatpush1.msra.mxu0 %v817
    %865 = vmatprep.subr.mxu0 0.0
    %866 = vmatpush2.msra.mxu0 0.0
    %867 = vmatprep.subr.mxu0 0.0
    %868 = vmatpush2.msra.mxu0 0.0
    %869 = vmatprep.subr.mxu0 0.0
    %870 = vmatpush2.msra.mxu0 0.0
    %871 = vmatprep.subr.mxu0 0.0
    %872 = vmatpush2.msra.mxu0 0.0
    %873 = vmatprep.subr.mxu0 0.0
    %874 = vmatpush2.msra.mxu0 0.0
    %875 = vmatprep.subr.mxu0 0.0
    %876 = vmatpush2.msra.mxu0 0.0
    %877 = vmatprep.subr.mxu0 0.0
    %878 = vmatpush2.msra.mxu0 0.0
    %879 = vmatprep.subr.mxu0 0.0
    %880 = vmatpush2.msra.mxu0 0.0
    %881 = vmatprep.subr.mxu0 0.0
    %882 = vmatpush2.msra.mxu0 0.0
    %883 = vmatprep.subr.mxu0 0.0
    %884 = vmatpush2.msra.mxu0 0.0
    %885 = vmatprep.subr.mxu0 0.0
    %886 = vmatpush2.msra.mxu0 0.0
    %887 = vmatprep.subr.mxu0 0.0
    %888 = vmatpush2.msra.mxu0 0.0
    %889 = vmatprep.subr.mxu0 0.0
    %890 = vmatpush2.msra.mxu0 0.0
    %891 = vmatprep.subr.mxu0 0.0
    %892 = vmatpush2.msra.mxu0 0.0
    %893 = vmatprep.subr.mxu0 0.0
    %894 = vmatpush2.msra.mxu0 0.0
    %895 = vmatprep.subr.mxu0 0.0
    %896 = vmatpush2.msra.mxu0 0.0
    %897 = vmatprep.mubr.f32.mxu0 0.0
    %898 = vmatmul.mubr.f32.gmra.mxu0 %v693
    %v899 = vpop.f32.mrf.mxu0
    %v900 = vadd.f32 %v51, %v899
    %v901 = vpop.f32.mrf.mxu0
    %902 = vdwg.mxu0
    %v903 = vmul.f32 %v809, %v900
    %v904 = vadd.f32 %v699, %v903
    %v905 = vtanh.pop %v904
    %v906 = vsub.f32 %v693, %v905
    %v907 = vmul.f32 %v816, %v906
    %v908 = vadd.f32 %v905, %v907
    %s909 = scalar_lea.vmem [#allocation7], 24
    %910 = vst [vmem:[%s909] sm:$0xff] %v908
    %s911 = scalar_lea.vmem [#allocation2], 96
    %v912 = vld [vmem:[%s911] sm:$0xff]
    %v913 = vld [vmem:[%s911 + $0x8] sm:$0xff]
    %v914 = vld [vmem:[%s911 + $0x10] sm:$0xff]
    %v915 = vld [vmem:[#allocation5] sm:$0xff]
    %v916 = vld [vmem:[#allocation5 + $0x8] sm:$0xff]
    %v917 = vld [vmem:[#allocation5 + $0x18] sm:$0xff]
    %v918 = vld [vmem:[#allocation5 + $0x20] sm:$0xff]
    %v919 = vld [vmem:[#allocation5 + $0x30] sm:$0xff]
    %v920 = vld [vmem:[#allocation5 + $0x38] sm:$0xff]
    %v921 = vld [vmem:[#allocation5 + $0x48] sm:$0xff]
    %v922 = vld [vmem:[#allocation5 + $0x50] sm:$0xff]
    %v923 = vld [vmem:[#allocation5 + $0x60] sm:$0xff]
    %v924 = vld [vmem:[#allocation5 + $0x68] sm:$0xff]
    %v925 = vld [vmem:[#allocation5 + $0x78] sm:$0xff]
    %v926 = vld [vmem:[#allocation5 + $0x80] sm:$0xff]
    %v927 = vld [vmem:[#allocation5 + $0x90] sm:$0xff]
    %v928 = vld [vmem:[#allocation5 + $0x98] sm:$0xff]
    %v929 = vld [vmem:[#allocation5 + $0xa8] sm:$0xff]
    %v930 = vld [vmem:[#allocation5 + $0xb0] sm:$0xff]
    %v931 = vld [vmem:[#allocation5 + $0xc0] sm:$0xff]
    %v932 = vld [vmem:[#allocation5 + $0xc8] sm:$0xff]
    %v933 = vld [vmem:[#allocation5 + $0xd8] sm:$0xff]
    %v934 = vld [vmem:[#allocation5 + $0xe0] sm:$0xff]
    %v935 = vld [vmem:[#allocation5 + $0xf0] sm:$0xff]
    %v936 = vld [vmem:[#allocation5 + $0xf8] sm:$0xff]
    %v937 = vld [vmem:[#allocation5 + $0x108] sm:$0xff]
    %v938 = vld [vmem:[#allocation5 + $0x110] sm:$0xff]
    %v939 = vld [vmem:[#allocation5 + $0x120] sm:$0xff]
    %v940 = vld [vmem:[#allocation5 + $0x128] sm:$0xff]
    %v941 = vld [vmem:[#allocation5 + $0x138] sm:$0xff]
    %v942 = vld [vmem:[#allocation5 + $0x140] sm:$0xff]
    %v943 = vld [vmem:[#allocation5 + $0x150] sm:$0xff]
    %v944 = vld [vmem:[#allocation5 + $0x158] sm:$0xff]
    %v945 = vld [vmem:[#allocation5 + $0x168] sm:$0xff]
    %v946 = vld [vmem:[#allocation5 + $0x170] sm:$0xff]
    %947 = vmatprep.subr.mxu0 %v946
    %948 = vmatpush1.msra.mxu0 %v945
    %949 = vmatprep.subr.mxu0 %v944
    %950 = vmatpush1.msra.mxu0 %v943
    %951 = vmatprep.subr.mxu0 %v942
    %952 = vmatpush1.msra.mxu0 %v941
    %953 = vmatprep.subr.mxu0 %v940
    %954 = vmatpush1.msra.mxu0 %v939
    %955 = vmatprep.subr.mxu0 %v938
    %956 = vmatpush1.msra.mxu0 %v937
    %957 = vmatprep.subr.mxu0 %v936
    %958 = vmatpush1.msra.mxu0 %v935
    %959 = vmatprep.subr.mxu0 %v934
    %960 = vmatpush1.msra.mxu0 %v933
    %961 = vmatprep.subr.mxu0 %v932
    %962 = vmatpush1.msra.mxu0 %v931
    %963 = vmatprep.subr.mxu0 %v930
    %964 = vmatpush1.msra.mxu0 %v929
    %965 = vmatprep.subr.mxu0 %v928
    %966 = vmatpush1.msra.mxu0 %v927
    %967 = vmatprep.subr.mxu0 %v926
    %968 = vmatpush1.msra.mxu0 %v925
    %969 = vmatprep.subr.mxu0 %v924
    %970 = vmatpush1.msra.mxu0 %v923
    %971 = vmatprep.subr.mxu0 %v922
    %972 = vmatpush1.msra.mxu0 %v921
    %973 = vmatprep.subr.mxu0 %v920
    %974 = vmatpush1.msra.mxu0 %v919
    %975 = vmatprep.subr.mxu0 %v918
    %976 = vmatpush1.msra.mxu0 %v917
    %977 = vmatprep.subr.mxu0 %v916
    %978 = vmatpush1.msra.mxu0 %v915
    %979 = vmatprep.subr.mxu0 0.0
    %980 = vmatpush2.msra.mxu0 0.0
    %981 = vmatprep.subr.mxu0 0.0
    %982 = vmatpush2.msra.mxu0 0.0
    %983 = vmatprep.subr.mxu0 0.0
    %984 = vmatpush2.msra.mxu0 0.0
    %985 = vmatprep.subr.mxu0 0.0
    %986 = vmatpush2.msra.mxu0 0.0
    %987 = vmatprep.subr.mxu0 0.0
    %988 = vmatpush2.msra.mxu0 0.0
    %989 = vmatprep.subr.mxu0 0.0
    %990 = vmatpush2.msra.mxu0 0.0
    %991 = vmatprep.subr.mxu0 0.0
    %992 = vmatpush2.msra.mxu0 0.0
    %993 = vmatprep.subr.mxu0 0.0
    %994 = vmatpush2.msra.mxu0 0.0
    %995 = vmatprep.subr.mxu0 0.0
    %996 = vmatpush2.msra.mxu0 0.0
    %997 = vmatprep.subr.mxu0 0.0
    %998 = vmatpush2.msra.mxu0 0.0
    %999 = vmatprep.subr.mxu0 0.0
    %1000 = vmatpush2.msra.mxu0 0.0
    %1001 = vmatprep.subr.mxu0 0.0
    %1002 = vmatpush2.msra.mxu0 0.0
    %1003 = vmatprep.subr.mxu0 0.0
    %1004 = vmatpush2.msra.mxu0 0.0
    %1005 = vmatprep.subr.mxu0 0.0
    %1006 = vmatpush2.msra.mxu0 0.0
    %1007 = vmatprep.subr.mxu0 0.0
    %1008 = vmatpush2.msra.mxu0 0.0
    %1009 = vmatprep.subr.mxu0 0.0
    %1010 = vmatpush2.msra.mxu0 0.0
    %1011 = vmatprep.mubr.f32.mxu0 0.0
    %1012 = vmatmul.mubr.f32.gmra.mxu0 %v908
    %v1013 = vpop.f32.mrf.mxu0
    %v1014 = vadd.f32 0.0, %v1013
    %v1015 = vpop.f32.mrf.mxu0
    %v1016 = vadd.f32 0.0, %v1015
    %1017 = vdwg.mxu0
    %v1018 = vadd.f32 %v912, %v1014
    %v1019 = vxor.u32 %v1018, 2147483648
    %v1020 = vmul.f32 %v1019, 1.442695
    %v1021 = vpow.pop %v1020
    %v1022 = vadd.f32 %v1021, 1.0
    %v1023 = vrcp.pop %v1022
    %v1024 = vmul.f32 1.0, %v1023
    %v1025 = vadd.f32 %v913, %v1016
    %v1026 = vxor.u32 %v1025, 2147483648
    %v1027 = vmul.f32 %v1026, 1.442695
    %v1028 = vpow.pop %v1027
    %v1029 = vadd.f32 %v1028, 1.0
    %v1030 = vrcp.pop %v1029
    %v1031 = vmul.f32 1.0, %v1030
    %v1032 = vld [vmem:[#allocation5 + $0x10] sm:$0xff]
    %v1033 = vld [vmem:[#allocation5 + $0x28] sm:$0xff]
    %v1034 = vld [vmem:[#allocation5 + $0x40] sm:$0xff]
    %v1035 = vld [vmem:[#allocation5 + $0x58] sm:$0xff]
    %v1036 = vld [vmem:[#allocation5 + $0x70] sm:$0xff]
    %v1037 = vld [vmem:[#allocation5 + $0x88] sm:$0xff]
    %v1038 = vld [vmem:[#allocation5 + $0xa0] sm:$0xff]
    %v1039 = vld [vmem:[#allocation5 + $0xb8] sm:$0xff]
    %v1040 = vld [vmem:[#allocation5 + $0xd0] sm:$0xff]
    %v1041 = vld [vmem:[#allocation5 + $0xe8] sm:$0xff]
    %v1042 = vld [vmem:[#allocation5 + $0x100] sm:$0xff]
    %v1043 = vld [vmem:[#allocation5 + $0x118] sm:$0xff]
    %v1044 = vld [vmem:[#allocation5 + $0x130] sm:$0xff]
    %v1045 = vld [vmem:[#allocation5 + $0x148] sm:$0xff]
    %v1046 = vld [vmem:[#allocation5 + $0x160] sm:$0xff]
    %v1047 = vld [vmem:[#allocation5 + $0x178] sm:$0xff]
    %1048 = vmatprep.subr.mxu0 0.0
    %1049 = vmatpush1.msra.mxu0 %v1047
    %1050 = vmatprep.subr.mxu0 0.0
    %1051 = vmatpush1.msra.mxu0 %v1046
    %1052 = vmatprep.subr.mxu0 0.0
    %1053 = vmatpush1.msra.mxu0 %v1045
    %1054 = vmatprep.subr.mxu0 0.0
    %1055 = vmatpush1.msra.mxu0 %v1044
    %1056 = vmatprep.subr.mxu0 0.0
    %1057 = vmatpush1.msra.mxu0 %v1043
    %1058 = vmatprep.subr.mxu0 0.0
    %1059 = vmatpush1.msra.mxu0 %v1042
    %1060 = vmatprep.subr.mxu0 0.0
    %1061 = vmatpush1.msra.mxu0 %v1041
    %1062 = vmatprep.subr.mxu0 0.0
    %1063 = vmatpush1.msra.mxu0 %v1040
    %1064 = vmatprep.subr.mxu0 0.0
    %1065 = vmatpush1.msra.mxu0 %v1039
    %1066 = vmatprep.subr.mxu0 0.0
    %1067 = vmatpush1.msra.mxu0 %v1038
    %1068 = vmatprep.subr.mxu0 0.0
    %1069 = vmatpush1.msra.mxu0 %v1037
    %1070 = vmatprep.subr.mxu0 0.0
    %1071 = vmatpush1.msra.mxu0 %v1036
    %1072 = vmatprep.subr.mxu0 0.0
    %1073 = vmatpush1.msra.mxu0 %v1035
    %1074 = vmatprep.subr.mxu0 0.0
    %1075 = vmatpush1.msra.mxu0 %v1034
    %1076 = vmatprep.subr.mxu0 0.0
    %1077 = vmatpush1.msra.mxu0 %v1033
    %1078 = vmatprep.subr.mxu0 0.0
    %1079 = vmatpush1.msra.mxu0 %v1032
    %1080 = vmatprep.subr.mxu0 0.0
    %1081 = vmatpush2.msra.mxu0 0.0
    %1082 = vmatprep.subr.mxu0 0.0
    %1083 = vmatpush2.msra.mxu0 0.0
    %1084 = vmatprep.subr.mxu0 0.0
    %1085 = vmatpush2.msra.mxu0 0.0
    %1086 = vmatprep.subr.mxu0 0.0
    %1087 = vmatpush2.msra.mxu0 0.0
    %1088 = vmatprep.subr.mxu0 0.0
    %1089 = vmatpush2.msra.mxu0 0.0
    %1090 = vmatprep.subr.mxu0 0.0
    %1091 = vmatpush2.msra.mxu0 0.0
    %1092 = vmatprep.subr.mxu0 0.0
    %1093 = vmatpush2.msra.mxu0 0.0
    %1094 = vmatprep.subr.mxu0 0.0
    %1095 = vmatpush2.msra.mxu0 0.0
    %1096 = vmatprep.subr.mxu0 0.0
    %1097 = vmatpush2.msra.mxu0 0.0
    %1098 = vmatprep.subr.mxu0 0.0
    %1099 = vmatpush2.msra.mxu0 0.0
    %1100 = vmatprep.subr.mxu0 0.0
    %1101 = vmatpush2.msra.mxu0 0.0
    %1102 = vmatprep.subr.mxu0 0.0
    %1103 = vmatpush2.msra.mxu0 0.0
    %1104 = vmatprep.subr.mxu0 0.0
    %1105 = vmatpush2.msra.mxu0 0.0
    %1106 = vmatprep.subr.mxu0 0.0
    %1107 = vmatpush2.msra.mxu0 0.0
    %1108 = vmatprep.subr.mxu0 0.0
    %1109 = vmatpush2.msra.mxu0 0.0
    %1110 = vmatprep.subr.mxu0 0.0
    %1111 = vmatpush2.msra.mxu0 0.0
    %1112 = vmatprep.mubr.f32.mxu0 0.0
    %1113 = vmatmul.mubr.f32.gmra.mxu0 %v908
    %v1114 = vpop.f32.mrf.mxu0
    %v1115 = vadd.f32 %v51, %v1114
    %v1116 = vpop.f32.mrf.mxu0
    %1117 = vdwg.mxu0
    %v1118 = vmul.f32 %v1024, %v1115
    %v1119 = vadd.f32 %v914, %v1118
    %v1120 = vtanh.pop %v1119
    %v1121 = vsub.f32 %v908, %v1120
    %v1122 = vmul.f32 %v1031, %v1121
    %v1123 = vadd.f32 %v1120, %v1122
    %s1124 = scalar_lea.vmem [#allocation7], 32
    %1125 = vst [vmem:[%s1124] sm:$0xff] %v1123
    %s1126 = scalar_lea.vmem [#allocation2], 120
    %v1127 = vld [vmem:[%s1126] sm:$0xff]
    %v1128 = vld [vmem:[%s1126 + $0x8] sm:$0xff]
    %v1129 = vld [vmem:[%s1126 + $0x10] sm:$0xff]
    %v1130 = vld [vmem:[#allocation5] sm:$0xff]
    %v1131 = vld [vmem:[#allocation5 + $0x8] sm:$0xff]
    %v1132 = vld [vmem:[#allocation5 + $0x18] sm:$0xff]
    %v1133 = vld [vmem:[#allocation5 + $0x20] sm:$0xff]
    %v1134 = vld [vmem:[#allocation5 + $0x30] sm:$0xff]
    %v1135 = vld [vmem:[#allocation5 + $0x38] sm:$0xff]
    %v1136 = vld [vmem:[#allocation5 + $0x48] sm:$0xff]
    %v1137 = vld [vmem:[#allocation5 + $0x50] sm:$0xff]
    %v1138 = vld [vmem:[#allocation5 + $0x60] sm:$0xff]
    %v1139 = vld [vmem:[#allocation5 + $0x68] sm:$0xff]
    %v1140 = vld [vmem:[#allocation5 + $0x78] sm:$0xff]
    %v1141 = vld [vmem:[#allocation5 + $0x80] sm:$0xff]
    %v1142 = vld [vmem:[#allocation5 + $0x90] sm:$0xff]
    %v1143 = vld [vmem:[#allocation5 + $0x98] sm:$0xff]
    %v1144 = vld [vmem:[#allocation5 + $0xa8] sm:$0xff]
    %v1145 = vld [vmem:[#allocation5 + $0xb0] sm:$0xff]
    %v1146 = vld [vmem:[#allocation5 + $0xc0] sm:$0xff]
    %v1147 = vld [vmem:[#allocation5 + $0xc8] sm:$0xff]
    %v1148 = vld [vmem:[#allocation5 + $0xd8] sm:$0xff]
    %v1149 = vld [vmem:[#allocation5 + $0xe0] sm:$0xff]
    %v1150 = vld [vmem:[#allocation5 + $0xf0] sm:$0xff]
    %v1151 = vld [vmem:[#allocation5 + $0xf8] sm:$0xff]
    %v1152 = vld [vmem:[#allocation5 + $0x108] sm:$0xff]
    %v1153 = vld [vmem:[#allocation5 + $0x110] sm:$0xff]
    %v1154 = vld [vmem:[#allocation5 + $0x120] sm:$0xff]
    %v1155 = vld [vmem:[#allocation5 + $0x128] sm:$0xff]
    %v1156 = vld [vmem:[#allocation5 + $0x138] sm:$0xff]
    %v1157 = vld [vmem:[#allocation5 + $0x140] sm:$0xff]
    %v1158 = vld [vmem:[#allocation5 + $0x150] sm:$0xff]
    %v1159 = vld [vmem:[#allocation5 + $0x158] sm:$0xff]
    %v1160 = vld [vmem:[#allocation5 + $0x168] sm:$0xff]
    %v1161 = vld [vmem:[#allocation5 + $0x170] sm:$0xff]
    %1162 = vmatprep.subr.mxu0 %v1161
    %1163 = vmatpush1.msra.mxu0 %v1160
    %1164 = vmatprep.subr.mxu0 %v1159
    %1165 = vmatpush1.msra.mxu0 %v1158
    %1166 = vmatprep.subr.mxu0 %v1157
    %1167 = vmatpush1.msra.mxu0 %v1156
    %1168 = vmatprep.subr.mxu0 %v1155
    %1169 = vmatpush1.msra.mxu0 %v1154
    %1170 = vmatprep.subr.mxu0 %v1153
    %1171 = vmatpush1.msra.mxu0 %v1152
    %1172 = vmatprep.subr.mxu0 %v1151
    %1173 = vmatpush1.msra.mxu0 %v1150
    %1174 = vmatprep.subr.mxu0 %v1149
    %1175 = vmatpush1.msra.mxu0 %v1148
    %1176 = vmatprep.subr.mxu0 %v1147
    %1177 = vmatpush1.msra.mxu0 %v1146
    %1178 = vmatprep.subr.mxu0 %v1145
    %1179 = vmatpush1.msra.mxu0 %v1144
    %1180 = vmatprep.subr.mxu0 %v1143
    %1181 = vmatpush1.msra.mxu0 %v1142
    %1182 = vmatprep.subr.mxu0 %v1141
    %1183 = vmatpush1.msra.mxu0 %v1140
    %1184 = vmatprep.subr.mxu0 %v1139
    %1185 = vmatpush1.msra.mxu0 %v1138
    %1186 = vmatprep.subr.mxu0 %v1137
    %1187 = vmatpush1.msra.mxu0 %v1136
    %1188 = vmatprep.subr.mxu0 %v1135
    %1189 = vmatpush1.msra.mxu0 %v1134
    %1190 = vmatprep.subr.mxu0 %v1133
    %1191 = vmatpush1.msra.mxu0 %v1132
    %1192 = vmatprep.subr.mxu0 %v1131
    %1193 = vmatpush1.msra.mxu0 %v1130
    %1194 = vmatprep.subr.mxu0 0.0
    %1195 = vmatpush2.msra.mxu0 0.0
    %1196 = vmatprep.subr.mxu0 0.0
    %1197 = vmatpush2.msra.mxu0 0.0
    %1198 = vmatprep.subr.mxu0 0.0
    %1199 = vmatpush2.msra.mxu0 0.0
    %1200 = vmatprep.subr.mxu0 0.0
    %1201 = vmatpush2.msra.mxu0 0.0
    %1202 = vmatprep.subr.mxu0 0.0
    %1203 = vmatpush2.msra.mxu0 0.0
    %1204 = vmatprep.subr.mxu0 0.0
    %1205 = vmatpush2.msra.mxu0 0.0
    %1206 = vmatprep.subr.mxu0 0.0
    %1207 = vmatpush2.msra.mxu0 0.0
    %1208 = vmatprep.subr.mxu0 0.0
    %1209 = vmatpush2.msra.mxu0 0.0
    %1210 = vmatprep.subr.mxu0 0.0
    %1211 = vmatpush2.msra.mxu0 0.0
    %1212 = vmatprep.subr.mxu0 0.0
    %1213 = vmatpush2.msra.mxu0 0.0
    %1214 = vmatprep.subr.mxu0 0.0
    %1215 = vmatpush2.msra.mxu0 0.0
    %1216 = vmatprep.subr.mxu0 0.0
    %1217 = vmatpush2.msra.mxu0 0.0
    %1218 = vmatprep.subr.mxu0 0.0
    %1219 = vmatpush2.msra.mxu0 0.0
    %1220 = vmatprep.subr.mxu0 0.0
    %1221 = vmatpush2.msra.mxu0 0.0
    %1222 = vmatprep.subr.mxu0 0.0
    %1223 = vmatpush2.msra.mxu0 0.0
    %1224 = vmatprep.subr.mxu0 0.0
    %1225 = vmatpush2.msra.mxu0 0.0
    %1226 = vmatprep.mubr.f32.mxu0 0.0
    %1227 = vmatmul.mubr.f32.gmra.mxu0 %v1123
    %v1228 = vpop.f32.mrf.mxu0
    %v1229 = vadd.f32 0.0, %v1228
    %v1230 = vpop.f32.mrf.mxu0
    %v1231 = vadd.f32 0.0, %v1230
    %1232 = vdwg.mxu0
    %v1233 = vadd.f32 %v1127, %v1229
    %v1234 = vxor.u32 %v1233, 2147483648
    %v1235 = vmul.f32 %v1234, 1.442695
    %v1236 = vpow.pop %v1235
    %v1237 = vadd.f32 %v1236, 1.0
    %v1238 = vrcp.pop %v1237
    %v1239 = vmul.f32 1.0, %v1238
    %v1240 = vadd.f32 %v1128, %v1231
    %v1241 = vxor.u32 %v1240, 2147483648
    %v1242 = vmul.f32 %v1241, 1.442695
    %v1243 = vpow.pop %v1242
    %v1244 = vadd.f32 %v1243, 1.0
    %v1245 = vrcp.pop %v1244
    %v1246 = vmul.f32 1.0, %v1245
    %v1247 = vld [vmem:[#allocation5 + $0x10] sm:$0xff]
    %v1248 = vld [vmem:[#allocation5 + $0x28] sm:$0xff]
    %v1249 = vld [vmem:[#allocation5 + $0x40] sm:$0xff]
    %v1250 = vld [vmem:[#allocation5 + $0x58] sm:$0xff]
    %v1251 = vld [vmem:[#allocation5 + $0x70] sm:$0xff]
    %v1252 = vld [vmem:[#allocation5 + $0x88] sm:$0xff]
    %v1253 = vld [vmem:[#allocation5 + $0xa0] sm:$0xff]
    %v1254 = vld [vmem:[#allocation5 + $0xb8] sm:$0xff]
    %v1255 = vld [vmem:[#allocation5 + $0xd0] sm:$0xff]
    %v1256 = vld [vmem:[#allocation5 + $0xe8] sm:$0xff]
    %v1257 = vld [vmem:[#allocation5 + $0x100] sm:$0xff]
    %v1258 = vld [vmem:[#allocation5 + $0x118] sm:$0xff]
    %v1259 = vld [vmem:[#allocation5 + $0x130] sm:$0xff]
    %v1260 = vld [vmem:[#allocation5 + $0x148] sm:$0xff]
    %v1261 = vld [vmem:[#allocation5 + $0x160] sm:$0xff]
    %v1262 = vld [vmem:[#allocation5 + $0x178] sm:$0xff]
    %1263 = vmatprep.subr.mxu0 0.0
    %1264 = vmatpush1.msra.mxu0 %v1262
    %1265 = vmatprep.subr.mxu0 0.0
    %1266 = vmatpush1.msra.mxu0 %v1261
    %1267 = vmatprep.subr.mxu0 0.0
    %1268 = vmatpush1.msra.mxu0 %v1260
    %1269 = vmatprep.subr.mxu0 0.0
    %1270 = vmatpush1.msra.mxu0 %v1259
    %1271 = vmatprep.subr.mxu0 0.0
    %1272 = vmatpush1.msra.mxu0 %v1258
    %1273 = vmatprep.subr.mxu0 0.0
    %1274 = vmatpush1.msra.mxu0 %v1257
    %1275 = vmatprep.subr.mxu0 0.0
    %1276 = vmatpush1.msra.mxu0 %v1256
    %1277 = vmatprep.subr.mxu0 0.0
    %1278 = vmatpush1.msra.mxu0 %v1255
    %1279 = vmatprep.subr.mxu0 0.0
    %1280 = vmatpush1.msra.mxu0 %v1254
    %1281 = vmatprep.subr.mxu0 0.0
    %1282 = vmatpush1.msra.mxu0 %v1253
    %1283 = vmatprep.subr.mxu0 0.0
    %1284 = vmatpush1.msra.mxu0 %v1252
    %1285 = vmatprep.subr.mxu0 0.0
    %1286 = vmatpush1.msra.mxu0 %v1251
    %1287 = vmatprep.subr.mxu0 0.0
    %1288 = vmatpush1.msra.mxu0 %v1250
    %1289 = vmatprep.subr.mxu0 0.0
    %1290 = vmatpush1.msra.mxu0 %v1249
    %1291 = vmatprep.subr.mxu0 0.0
    %1292 = vmatpush1.msra.mxu0 %v1248
    %1293 = vmatprep.subr.mxu0 0.0
    %1294 = vmatpush1.msra.mxu0 %v1247
    %1295 = vmatprep.subr.mxu0 0.0
    %1296 = vmatpush2.msra.mxu0 0.0
    %1297 = vmatprep.subr.mxu0 0.0
    %1298 = vmatpush2.msra.mxu0 0.0
    %1299 = vmatprep.subr.mxu0 0.0
    %1300 = vmatpush2.msra.mxu0 0.0
    %1301 = vmatprep.subr.mxu0 0.0
    %1302 = vmatpush2.msra.mxu0 0.0
    %1303 = vmatprep.subr.mxu0 0.0
    %1304 = vmatpush2.msra.mxu0 0.0
    %1305 = vmatprep.subr.mxu0 0.0
    %1306 = vmatpush2.msra.mxu0 0.0
    %1307 = vmatprep.subr.mxu0 0.0
    %1308 = vmatpush2.msra.mxu0 0.0
    %1309 = vmatprep.subr.mxu0 0.0
    %1310 = vmatpush2.msra.mxu0 0.0
    %1311 = vmatprep.subr.mxu0 0.0
    %1312 = vmatpush2.msra.mxu0 0.0
    %1313 = vmatprep.subr.mxu0 0.0
    %1314 = vmatpush2.msra.mxu0 0.0
    %1315 = vmatprep.subr.mxu0 0.0
    %1316 = vmatpush2.msra.mxu0 0.0
    %1317 = vmatprep.subr.mxu0 0.0
    %1318 = vmatpush2.msra.mxu0 0.0
    %1319 = vmatprep.subr.mxu0 0.0
    %1320 = vmatpush2.msra.mxu0 0.0
    %1321 = vmatprep.subr.mxu0 0.0
    %1322 = vmatpush2.msra.mxu0 0.0
    %1323 = vmatprep.subr.mxu0 0.0
    %1324 = vmatpush2.msra.mxu0 0.0
    %1325 = vmatprep.subr.mxu0 0.0
    %1326 = vmatpush2.msra.mxu0 0.0
    %1327 = vmatprep.mubr.f32.mxu0 0.0
    %1328 = vmatmul.mubr.f32.gmra.mxu0 %v1123
    %v1329 = vpop.f32.mrf.mxu0
    %v1330 = vadd.f32 %v51, %v1329
    %v1331 = vpop.f32.mrf.mxu0
    %1332 = vdwg.mxu0
    %v1333 = vmul.f32 %v1239, %v1330
    %v1334 = vadd.f32 %v1129, %v1333
    %v1335 = vtanh.pop %v1334
    %v1336 = vsub.f32 %v1123, %v1335
    %v1337 = vmul.f32 %v1246, %v1336
    %v1338 = vadd.f32 %v1335, %v1337
    %s1339 = scalar_lea.vmem [#allocation7], 40
    %1340 = vst [vmem:[%s1339] sm:$0xff] %v1338
    %s1341 = scalar_lea.vmem [#allocation2], 144
    %v1342 = vld [vmem:[%s1341] sm:$0xff]
    %v1343 = vld [vmem:[%s1341 + $0x8] sm:$0xff]
    %v1344 = vld [vmem:[%s1341 + $0x10] sm:$0xff]
    %v1345 = vld [vmem:[#allocation5] sm:$0xff]
    %v1346 = vld [vmem:[#allocation5 + $0x8] sm:$0xff]
    %v1347 = vld [vmem:[#allocation5 + $0x18] sm:$0xff]
    %v1348 = vld [vmem:[#allocation5 + $0x20] sm:$0xff]
    %v1349 = vld [vmem:[#allocation5 + $0x30] sm:$0xff]
    %v1350 = vld [vmem:[#allocation5 + $0x38] sm:$0xff]
    %v1351 = vld [vmem:[#allocation5 + $0x48] sm:$0xff]
    %v1352 = vld [vmem:[#allocation5 + $0x50] sm:$0xff]
    %v1353 = vld [vmem:[#allocation5 + $0x60] sm:$0xff]
    %v1354 = vld [vmem:[#allocation5 + $0x68] sm:$0xff]
    %v1355 = vld [vmem:[#allocation5 + $0x78] sm:$0xff]
    %v1356 = vld [vmem:[#allocation5 + $0x80] sm:$0xff]
    %v1357 = vld [vmem:[#allocation5 + $0x90] sm:$0xff]
    %v1358 = vld [vmem:[#allocation5 + $0x98] sm:$0xff]
    %v1359 = vld [vmem:[#allocation5 + $0xa8] sm:$0xff]
    %v1360 = vld [vmem:[#allocation5 + $0xb0] sm:$0xff]
    %v1361 = vld [vmem:[#allocation5 + $0xc0] sm:$0xff]
    %v1362 = vld [vmem:[#allocation5 + $0xc8] sm:$0xff]
    %v1363 = vld [vmem:[#allocation5 + $0xd8] sm:$0xff]
    %v1364 = vld [vmem:[#allocation5 + $0xe0] sm:$0xff]
    %v1365 = vld [vmem:[#allocation5 + $0xf0] sm:$0xff]
    %v1366 = vld [vmem:[#allocation5 + $0xf8] sm:$0xff]
    %v1367 = vld [vmem:[#allocation5 + $0x108] sm:$0xff]
    %v1368 = vld [vmem:[#allocation5 + $0x110] sm:$0xff]
    %v1369 = vld [vmem:[#allocation5 + $0x120] sm:$0xff]
    %v1370 = vld [vmem:[#allocation5 + $0x128] sm:$0xff]
    %v1371 = vld [vmem:[#allocation5 + $0x138] sm:$0xff]
    %v1372 = vld [vmem:[#allocation5 + $0x140] sm:$0xff]
    %v1373 = vld [vmem:[#allocation5 + $0x150] sm:$0xff]
    %v1374 = vld [vmem:[#allocation5 + $0x158] sm:$0xff]
    %v1375 = vld [vmem:[#allocation5 + $0x168] sm:$0xff]
    %v1376 = vld [vmem:[#allocation5 + $0x170] sm:$0xff]
    %1377 = vmatprep.subr.mxu0 %v1376
    %1378 = vmatpush1.msra.mxu0 %v1375
    %1379 = vmatprep.subr.mxu0 %v1374
    %1380 = vmatpush1.msra.mxu0 %v1373
    %1381 = vmatprep.subr.mxu0 %v1372
    %1382 = vmatpush1.msra.mxu0 %v1371
    %1383 = vmatprep.subr.mxu0 %v1370
    %1384 = vmatpush1.msra.mxu0 %v1369
    %1385 = vmatprep.subr.mxu0 %v1368
    %1386 = vmatpush1.msra.mxu0 %v1367
    %1387 = vmatprep.subr.mxu0 %v1366
    %1388 = vmatpush1.msra.mxu0 %v1365
    %1389 = vmatprep.subr.mxu0 %v1364
    %1390 = vmatpush1.msra.mxu0 %v1363
    %1391 = vmatprep.subr.mxu0 %v1362
    %1392 = vmatpush1.msra.mxu0 %v1361
    %1393 = vmatprep.subr.mxu0 %v1360
    %1394 = vmatpush1.msra.mxu0 %v1359
    %1395 = vmatprep.subr.mxu0 %v1358
    %1396 = vmatpush1.msra.mxu0 %v1357
    %1397 = vmatprep.subr.mxu0 %v1356
    %1398 = vmatpush1.msra.mxu0 %v1355
    %1399 = vmatprep.subr.mxu0 %v1354
    %1400 = vmatpush1.msra.mxu0 %v1353
    %1401 = vmatprep.subr.mxu0 %v1352
    %1402 = vmatpush1.msra.mxu0 %v1351
    %1403 = vmatprep.subr.mxu0 %v1350
    %1404 = vmatpush1.msra.mxu0 %v1349
    %1405 = vmatprep.subr.mxu0 %v1348
    %1406 = vmatpush1.msra.mxu0 %v1347
    %1407 = vmatprep.subr.mxu0 %v1346
    %1408 = vmatpush1.msra.mxu0 %v1345
    %1409 = vmatprep.subr.mxu0 0.0
    %1410 = vmatpush2.msra.mxu0 0.0
    %1411 = vmatprep.subr.mxu0 0.0
    %1412 = vmatpush2.msra.mxu0 0.0
    %1413 = vmatprep.subr.mxu0 0.0
    %1414 = vmatpush2.msra.mxu0 0.0
    %1415 = vmatprep.subr.mxu0 0.0
    %1416 = vmatpush2.msra.mxu0 0.0
    %1417 = vmatprep.subr.mxu0 0.0
    %1418 = vmatpush2.msra.mxu0 0.0
    %1419 = vmatprep.subr.mxu0 0.0
    %1420 = vmatpush2.msra.mxu0 0.0
    %1421 = vmatprep.subr.mxu0 0.0
    %1422 = vmatpush2.msra.mxu0 0.0
    %1423 = vmatprep.subr.mxu0 0.0
    %1424 = vmatpush2.msra.mxu0 0.0
    %1425 = vmatprep.subr.mxu0 0.0
    %1426 = vmatpush2.msra.mxu0 0.0
    %1427 = vmatprep.subr.mxu0 0.0
    %1428 = vmatpush2.msra.mxu0 0.0
    %1429 = vmatprep.subr.mxu0 0.0
    %1430 = vmatpush2.msra.mxu0 0.0
    %1431 = vmatprep.subr.mxu0 0.0
    %1432 = vmatpush2.msra.mxu0 0.0
    %1433 = vmatprep.subr.mxu0 0.0
    %1434 = vmatpush2.msra.mxu0 0.0
    %1435 = vmatprep.subr.mxu0 0.0
    %1436 = vmatpush2.msra.mxu0 0.0
    %1437 = vmatprep.subr.mxu0 0.0
    %1438 = vmatpush2.msra.mxu0 0.0
    %1439 = vmatprep.subr.mxu0 0.0
    %1440 = vmatpush2.msra.mxu0 0.0
    %1441 = vmatprep.mubr.f32.mxu0 0.0
    %1442 = vmatmul.mubr.f32.gmra.mxu0 %v1338
    %v1443 = vpop.f32.mrf.mxu0
    %v1444 = vadd.f32 0.0, %v1443
    %v1445 = vpop.f32.mrf.mxu0
    %v1446 = vadd.f32 0.0, %v1445
    %1447 = vdwg.mxu0
    %v1448 = vadd.f32 %v1342, %v1444
    %v1449 = vxor.u32 %v1448, 2147483648
    %v1450 = vmul.f32 %v1449, 1.442695
    %v1451 = vpow.pop %v1450
    %v1452 = vadd.f32 %v1451, 1.0
    %v1453 = vrcp.pop %v1452
    %v1454 = vmul.f32 1.0, %v1453
    %v1455 = vadd.f32 %v1343, %v1446
    %v1456 = vxor.u32 %v1455, 2147483648
    %v1457 = vmul.f32 %v1456, 1.442695
    %v1458 = vpow.pop %v1457
    %v1459 = vadd.f32 %v1458, 1.0
    %v1460 = vrcp.pop %v1459
    %v1461 = vmul.f32 1.0, %v1460
    %v1462 = vld [vmem:[#allocation5 + $0x10] sm:$0xff]
    %v1463 = vld [vmem:[#allocation5 + $0x28] sm:$0xff]
    %v1464 = vld [vmem:[#allocation5 + $0x40] sm:$0xff]
    %v1465 = vld [vmem:[#allocation5 + $0x58] sm:$0xff]
    %v1466 = vld [vmem:[#allocation5 + $0x70] sm:$0xff]
    %v1467 = vld [vmem:[#allocation5 + $0x88] sm:$0xff]
    %v1468 = vld [vmem:[#allocation5 + $0xa0] sm:$0xff]
    %v1469 = vld [vmem:[#allocation5 + $0xb8] sm:$0xff]
    %v1470 = vld [vmem:[#allocation5 + $0xd0] sm:$0xff]
    %v1471 = vld [vmem:[#allocation5 + $0xe8] sm:$0xff]
    %v1472 = vld [vmem:[#allocation5 + $0x100] sm:$0xff]
    %v1473 = vld [vmem:[#allocation5 + $0x118] sm:$0xff]
    %v1474 = vld [vmem:[#allocation5 + $0x130] sm:$0xff]
    %v1475 = vld [vmem:[#allocation5 + $0x148] sm:$0xff]
    %v1476 = vld [vmem:[#allocation5 + $0x160] sm:$0xff]
    %v1477 = vld [vmem:[#allocation5 + $0x178] sm:$0xff]
    %1478 = vmatprep.subr.mxu0 0.0
    %1479 = vmatpush1.msra.mxu0 %v1477
    %1480 = vmatprep.subr.mxu0 0.0
    %1481 = vmatpush1.msra.mxu0 %v1476
    %1482 = vmatprep.subr.mxu0 0.0
    %1483 = vmatpush1.msra.mxu0 %v1475
    %1484 = vmatprep.subr.mxu0 0.0
    %1485 = vmatpush1.msra.mxu0 %v1474
    %1486 = vmatprep.subr.mxu0 0.0
    %1487 = vmatpush1.msra.mxu0 %v1473
    %1488 = vmatprep.subr.mxu0 0.0
    %1489 = vmatpush1.msra.mxu0 %v1472
    %1490 = vmatprep.subr.mxu0 0.0
    %1491 = vmatpush1.msra.mxu0 %v1471
    %1492 = vmatprep.subr.mxu0 0.0
    %1493 = vmatpush1.msra.mxu0 %v1470
    %1494 = vmatprep.subr.mxu0 0.0
    %1495 = vmatpush1.msra.mxu0 %v1469
    %1496 = vmatprep.subr.mxu0 0.0
    %1497 = vmatpush1.msra.mxu0 %v1468
    %1498 = vmatprep.subr.mxu0 0.0
    %1499 = vmatpush1.msra.mxu0 %v1467
    %1500 = vmatprep.subr.mxu0 0.0
    %1501 = vmatpush1.msra.mxu0 %v1466
    %1502 = vmatprep.subr.mxu0 0.0
    %1503 = vmatpush1.msra.mxu0 %v1465
    %1504 = vmatprep.subr.mxu0 0.0
    %1505 = vmatpush1.msra.mxu0 %v1464
    %1506 = vmatprep.subr.mxu0 0.0
    %1507 = vmatpush1.msra.mxu0 %v1463
    %1508 = vmatprep.subr.mxu0 0.0
    %1509 = vmatpush1.msra.mxu0 %v1462
    %1510 = vmatprep.subr.mxu0 0.0
    %1511 = vmatpush2.msra.mxu0 0.0
    %1512 = vmatprep.subr.mxu0 0.0
    %1513 = vmatpush2.msra.mxu0 0.0
    %1514 = vmatprep.subr.mxu0 0.0
    %1515 = vmatpush2.msra.mxu0 0.0
    %1516 = vmatprep.subr.mxu0 0.0
    %1517 = vmatpush2.msra.mxu0 0.0
    %1518 = vmatprep.subr.mxu0 0.0
    %1519 = vmatpush2.msra.mxu0 0.0
    %1520 = vmatprep.subr.mxu0 0.0
    %1521 = vmatpush2.msra.mxu0 0.0
    %1522 = vmatprep.subr.mxu0 0.0
    %1523 = vmatpush2.msra.mxu0 0.0
    %1524 = vmatprep.subr.mxu0 0.0
    %1525 = vmatpush2.msra.mxu0 0.0
    %1526 = vmatprep.subr.mxu0 0.0
    %1527 = vmatpush2.msra.mxu0 0.0
    %1528 = vmatprep.subr.mxu0 0.0
    %1529 = vmatpush2.msra.mxu0 0.0
    %1530 = vmatprep.subr.mxu0 0.0
    %1531 = vmatpush2.msra.mxu0 0.0
    %1532 = vmatprep.subr.mxu0 0.0
    %1533 = vmatpush2.msra.mxu0 0.0
    %1534 = vmatprep.subr.mxu0 0.0
    %1535 = vmatpush2.msra.mxu0 0.0
    %1536 = vmatprep.subr.mxu0 0.0
    %1537 = vmatpush2.msra.mxu0 0.0
    %1538 = vmatprep.subr.mxu0 0.0
    %1539 = vmatpush2.msra.mxu0 0.0
    %1540 = vmatprep.subr.mxu0 0.0
    %1541 = vmatpush2.msra.mxu0 0.0
    %1542 = vmatprep.mubr.f32.mxu0 0.0
    %1543 = vmatmul.mubr.f32.gmra.mxu0 %v1338
    %v1544 = vpop.f32.mrf.mxu0
    %v1545 = vadd.f32 %v51, %v1544
    %v1546 = vpop.f32.mrf.mxu0
    %1547 = vdwg.mxu0
    %v1548 = vmul.f32 %v1454, %v1545
    %v1549 = vadd.f32 %v1344, %v1548
    %v1550 = vtanh.pop %v1549
    %v1551 = vsub.f32 %v1338, %v1550
    %v1552 = vmul.f32 %v1461, %v1551
    %v1553 = vadd.f32 %v1550, %v1552
    %s1554 = scalar_lea.vmem [#allocation7], 48
    %1555 = vst [vmem:[%s1554] sm:$0xff] %v1553
    %s1556 = scalar_lea.vmem [#allocation2], 168
    %v1557 = vld [vmem:[%s1556] sm:$0xff]
    %v1558 = vld [vmem:[%s1556 + $0x8] sm:$0xff]
    %v1559 = vld [vmem:[%s1556 + $0x10] sm:$0xff]
    %v1560 = vld [vmem:[#allocation5] sm:$0xff]
    %v1561 = vld [vmem:[#allocation5 + $0x8] sm:$0xff]
    %v1562 = vld [vmem:[#allocation5 + $0x18] sm:$0xff]
    %v1563 = vld [vmem:[#allocation5 + $0x20] sm:$0xff]
    %v1564 = vld [vmem:[#allocation5 + $0x30] sm:$0xff]
    %v1565 = vld [vmem:[#allocation5 + $0x38] sm:$0xff]
    %v1566 = vld [vmem:[#allocation5 + $0x48] sm:$0xff]
    %v1567 = vld [vmem:[#allocation5 + $0x50] sm:$0xff]
    %v1568 = vld [vmem:[#allocation5 + $0x60] sm:$0xff]
    %v1569 = vld [vmem:[#allocation5 + $0x68] sm:$0xff]
    %v1570 = vld [vmem:[#allocation5 + $0x78] sm:$0xff]
    %v1571 = vld [vmem:[#allocation5 + $0x80] sm:$0xff]
    %v1572 = vld [vmem:[#allocation5 + $0x90] sm:$0xff]
    %v1573 = vld [vmem:[#allocation5 + $0x98] sm:$0xff]
    %v1574 = vld [vmem:[#allocation5 + $0xa8] sm:$0xff]
    %v1575 = vld [vmem:[#allocation5 + $0xb0] sm:$0xff]
    %v1576 = vld [vmem:[#allocation5 + $0xc0] sm:$0xff]
    %v1577 = vld [vmem:[#allocation5 + $0xc8] sm:$0xff]
    %v1578 = vld [vmem:[#allocation5 + $0xd8] sm:$0xff]
    %v1579 = vld [vmem:[#allocation5 + $0xe0] sm:$0xff]
    %v1580 = vld [vmem:[#allocation5 + $0xf0] sm:$0xff]
    %v1581 = vld [vmem:[#allocation5 + $0xf8] sm:$0xff]
    %v1582 = vld [vmem:[#allocation5 + $0x108] sm:$0xff]
    %v1583 = vld [vmem:[#allocation5 + $0x110] sm:$0xff]
    %v1584 = vld [vmem:[#allocation5 + $0x120] sm:$0xff]
    %v1585 = vld [vmem:[#allocation5 + $0x128] sm:$0xff]
    %v1586 = vld [vmem:[#allocation5 + $0x138] sm:$0xff]
    %v1587 = vld [vmem:[#allocation5 + $0x140] sm:$0xff]
    %v1588 = vld [vmem:[#allocation5 + $0x150] sm:$0xff]
    %v1589 = vld [vmem:[#allocation5 + $0x158] sm:$0xff]
    %v1590 = vld [vmem:[#allocation5 + $0x168] sm:$0xff]
    %v1591 = vld [vmem:[#allocation5 + $0x170] sm:$0xff]
    %1592 = vmatprep.subr.mxu0 %v1591
    %1593 = vmatpush1.msra.mxu0 %v1590
    %1594 = vmatprep.subr.mxu0 %v1589
    %1595 = vmatpush1.msra.mxu0 %v1588
    %1596 = vmatprep.subr.mxu0 %v1587
    %1597 = vmatpush1.msra.mxu0 %v1586
    %1598 = vmatprep.subr.mxu0 %v1585
    %1599 = vmatpush1.msra.mxu0 %v1584
    %1600 = vmatprep.subr.mxu0 %v1583
    %1601 = vmatpush1.msra.mxu0 %v1582
    %1602 = vmatprep.subr.mxu0 %v1581
    %1603 = vmatpush1.msra.mxu0 %v1580
    %1604 = vmatprep.subr.mxu0 %v1579
    %1605 = vmatpush1.msra.mxu0 %v1578
    %1606 = vmatprep.subr.mxu0 %v1577
    %1607 = vmatpush1.msra.mxu0 %v1576
    %1608 = vmatprep.subr.mxu0 %v1575
    %1609 = vmatpush1.msra.mxu0 %v1574
    %1610 = vmatprep.subr.mxu0 %v1573
    %1611 = vmatpush1.msra.mxu0 %v1572
    %1612 = vmatprep.subr.mxu0 %v1571
    %1613 = vmatpush1.msra.mxu0 %v1570
    %1614 = vmatprep.subr.mxu0 %v1569
    %1615 = vmatpush1.msra.mxu0 %v1568
    %1616 = vmatprep.subr.mxu0 %v1567
    %1617 = vmatpush1.msra.mxu0 %v1566
    %1618 = vmatprep.subr.mxu0 %v1565
    %1619 = vmatpush1.msra.mxu0 %v1564
    %1620 = vmatprep.subr.mxu0 %v1563
    %1621 = vmatpush1.msra.mxu0 %v1562
    %1622 = vmatprep.subr.mxu0 %v1561
    %1623 = vmatpush1.msra.mxu0 %v1560
    %1624 = vmatprep.subr.mxu0 0.0
    %1625 = vmatpush2.msra.mxu0 0.0
    %1626 = vmatprep.subr.mxu0 0.0
    %1627 = vmatpush2.msra.mxu0 0.0
    %1628 = vmatprep.subr.mxu0 0.0
    %1629 = vmatpush2.msra.mxu0 0.0
    %1630 = vmatprep.subr.mxu0 0.0
    %1631 = vmatpush2.msra.mxu0 0.0
    %1632 = vmatprep.subr.mxu0 0.0
    %1633 = vmatpush2.msra.mxu0 0.0
    %1634 = vmatprep.subr.mxu0 0.0
    %1635 = vmatpush2.msra.mxu0 0.0
    %1636 = vmatprep.subr.mxu0 0.0
    %1637 = vmatpush2.msra.mxu0 0.0
    %1638 = vmatprep.subr.mxu0 0.0
    %1639 = vmatpush2.msra.mxu0 0.0
    %1640 = vmatprep.subr.mxu0 0.0
    %1641 = vmatpush2.msra.mxu0 0.0
    %1642 = vmatprep.subr.mxu0 0.0
    %1643 = vmatpush2.msra.mxu0 0.0
    %1644 = vmatprep.subr.mxu0 0.0
    %1645 = vmatpush2.msra.mxu0 0.0
    %1646 = vmatprep.subr.mxu0 0.0
    %1647 = vmatpush2.msra.mxu0 0.0
    %1648 = vmatprep.subr.mxu0 0.0
    %1649 = vmatpush2.msra.mxu0 0.0
    %1650 = vmatprep.subr.mxu0 0.0
    %1651 = vmatpush2.msra.mxu0 0.0
    %1652 = vmatprep.subr.mxu0 0.0
    %1653 = vmatpush2.msra.mxu0 0.0
    %1654 = vmatprep.subr.mxu0 0.0
    %1655 = vmatpush2.msra.mxu0 0.0
    %1656 = vmatprep.mubr.f32.mxu0 0.0
    %1657 = vmatmul.mubr.f32.gmra.mxu0 %v1553
    %v1658 = vpop.f32.mrf.mxu0
    %v1659 = vadd.f32 0.0, %v1658
    %v1660 = vpop.f32.mrf.mxu0
    %v1661 = vadd.f32 0.0, %v1660
    %1662 = vdwg.mxu0
    %v1663 = vadd.f32 %v1557, %v1659
    %v1664 = vxor.u32 %v1663, 2147483648
    %v1665 = vmul.f32 %v1664, 1.442695
    %v1666 = vpow.pop %v1665
    %v1667 = vadd.f32 %v1666, 1.0
    %v1668 = vrcp.pop %v1667
    %v1669 = vmul.f32 1.0, %v1668
    %v1670 = vadd.f32 %v1558, %v1661
    %v1671 = vxor.u32 %v1670, 2147483648
    %v1672 = vmul.f32 %v1671, 1.442695
    %v1673 = vpow.pop %v1672
    %v1674 = vadd.f32 %v1673, 1.0
    %v1675 = vrcp.pop %v1674
    %v1676 = vmul.f32 1.0, %v1675
    %v1677 = vld [vmem:[#allocation5 + $0x10] sm:$0xff]
    %v1678 = vld [vmem:[#allocation5 + $0x28] sm:$0xff]
    %v1679 = vld [vmem:[#allocation5 + $0x40] sm:$0xff]
    %v1680 = vld [vmem:[#allocation5 + $0x58] sm:$0xff]
    %v1681 = vld [vmem:[#allocation5 + $0x70] sm:$0xff]
    %v1682 = vld [vmem:[#allocation5 + $0x88] sm:$0xff]
    %v1683 = vld [vmem:[#allocation5 + $0xa0] sm:$0xff]
    %v1684 = vld [vmem:[#allocation5 + $0xb8] sm:$0xff]
    %v1685 = vld [vmem:[#allocation5 + $0xd0] sm:$0xff]
    %v1686 = vld [vmem:[#allocation5 + $0xe8] sm:$0xff]
    %v1687 = vld [vmem:[#allocation5 + $0x100] sm:$0xff]
    %v1688 = vld [vmem:[#allocation5 + $0x118] sm:$0xff]
    %v1689 = vld [vmem:[#allocation5 + $0x130] sm:$0xff]
    %v1690 = vld [vmem:[#allocation5 + $0x148] sm:$0xff]
    %v1691 = vld [vmem:[#allocation5 + $0x160] sm:$0xff]
    %v1692 = vld [vmem:[#allocation5 + $0x178] sm:$0xff]
    %1693 = vmatprep.subr.mxu0 0.0
    %1694 = vmatpush1.msra.mxu0 %v1692
    %1695 = vmatprep.subr.mxu0 0.0
    %1696 = vmatpush1.msra.mxu0 %v1691
    %1697 = vmatprep.subr.mxu0 0.0
    %1698 = vmatpush1.msra.mxu0 %v1690
    %1699 = vmatprep.subr.mxu0 0.0
    %1700 = vmatpush1.msra.mxu0 %v1689
    %1701 = vmatprep.subr.mxu0 0.0
    %1702 = vmatpush1.msra.mxu0 %v1688
    %1703 = vmatprep.subr.mxu0 0.0
    %1704 = vmatpush1.msra.mxu0 %v1687
    %1705 = vmatprep.subr.mxu0 0.0
    %1706 = vmatpush1.msra.mxu0 %v1686
    %1707 = vmatprep.subr.mxu0 0.0
    %1708 = vmatpush1.msra.mxu0 %v1685
    %1709 = vmatprep.subr.mxu0 0.0
    %1710 = vmatpush1.msra.mxu0 %v1684
    %1711 = vmatprep.subr.mxu0 0.0
    %1712 = vmatpush1.msra.mxu0 %v1683
    %1713 = vmatprep.subr.mxu0 0.0
    %1714 = vmatpush1.msra.mxu0 %v1682
    %1715 = vmatprep.subr.mxu0 0.0
    %1716 = vmatpush1.msra.mxu0 %v1681
    %1717 = vmatprep.subr.mxu0 0.0
    %1718 = vmatpush1.msra.mxu0 %v1680
    %1719 = vmatprep.subr.mxu0 0.0
    %1720 = vmatpush1.msra.mxu0 %v1679
    %1721 = vmatprep.subr.mxu0 0.0
    %1722 = vmatpush1.msra.mxu0 %v1678
    %1723 = vmatprep.subr.mxu0 0.0
    %1724 = vmatpush1.msra.mxu0 %v1677
    %1725 = vmatprep.subr.mxu0 0.0
    %1726 = vmatpush2.msra.mxu0 0.0
    %1727 = vmatprep.subr.mxu0 0.0
    %1728 = vmatpush2.msra.mxu0 0.0
    %1729 = vmatprep.subr.mxu0 0.0
    %1730 = vmatpush2.msra.mxu0 0.0
    %1731 = vmatprep.subr.mxu0 0.0
    %1732 = vmatpush2.msra.mxu0 0.0
    %1733 = vmatprep.subr.mxu0 0.0
    %1734 = vmatpush2.msra.mxu0 0.0
    %1735 = vmatprep.subr.mxu0 0.0
    %1736 = vmatpush2.msra.mxu0 0.0
    %1737 = vmatprep.subr.mxu0 0.0
    %1738 = vmatpush2.msra.mxu0 0.0
    %1739 = vmatprep.subr.mxu0 0.0
    %1740 = vmatpush2.msra.mxu0 0.0
    %1741 = vmatprep.subr.mxu0 0.0
    %1742 = vmatpush2.msra.mxu0 0.0
    %1743 = vmatprep.subr.mxu0 0.0
    %1744 = vmatpush2.msra.mxu0 0.0
    %1745 = vmatprep.subr.mxu0 0.0
    %1746 = vmatpush2.msra.mxu0 0.0
    %1747 = vmatprep.subr.mxu0 0.0
    %1748 = vmatpush2.msra.mxu0 0.0
    %1749 = vmatprep.subr.mxu0 0.0
    %1750 = vmatpush2.msra.mxu0 0.0
    %1751 = vmatprep.subr.mxu0 0.0
    %1752 = vmatpush2.msra.mxu0 0.0
    %1753 = vmatprep.subr.mxu0 0.0
    %1754 = vmatpush2.msra.mxu0 0.0
    %1755 = vmatprep.subr.mxu0 0.0
    %1756 = vmatpush2.msra.mxu0 0.0
    %1757 = vmatprep.mubr.f32.mxu0 0.0
    %1758 = vmatmul.mubr.f32.gmra.mxu0 %v1553
    %v1759 = vpop.f32.mrf.mxu0
    %v1760 = vadd.f32 %v51, %v1759
    %v1761 = vpop.f32.mrf.mxu0
    %1762 = vdwg.mxu0
    %v1763 = vmul.f32 %v1669, %v1760
    %v1764 = vadd.f32 %v1559, %v1763
    %v1765 = vtanh.pop %v1764
    %v1766 = vsub.f32 %v1553, %v1765
    %v1767 = vmul.f32 %v1676, %v1766
    %v1768 = vadd.f32 %v1765, %v1767
    %s1769 = scalar_lea.vmem [#allocation7], 56
    %1770 = vst [vmem:[%s1769] sm:$0xff] %v1768
    %1771 = vst [vmem:[#allocation8] sm:$0xff] %v1768
    // Predicated region
    $region22: #{tpu_custom_call.1} parent=1 // pred_check
      _
    $region23: #{tpu_custom_call.1} parent=1 // pred_check_branch
      %1773 = sbr.rel (0) target = $region25
    $region24: #{tpu_custom_call.1} parent=1 // pred_region
      %s1775 = ssub.s32 1024, 1024
      %1776 = vsyncadd [#allocation4], %s1775
      %s1777 = sshll.u32 [#allocation7], 4
      %s1778 = int_to_ptr.vmem [resolvable:$true] %s1777
      %1783 = dma.vmem_to_hbm [thread:$0]  %s1778, 1024, %s3, [#allocation4], 128, 128, 8
    $region25: #{tpu_custom_call.1} parent=1 // pred_fallthru
      _
    // Predicated region
    $region26: #{tpu_custom_call.1} parent=1 // pred_check
      _
    $region27: #{tpu_custom_call.1} parent=1 // pred_check_branch
      %1785 = sbr.rel (0) target = $region29
    $region28: #{tpu_custom_call.1} parent=1 // pred_region
      %s1787 = ssub.s32 128, 128
      %1788 = vsyncadd [#allocation9], %s1787
      %s1790 = sshll.u32 [#allocation8], 4
      %s1791 = int_to_ptr.vmem [resolvable:$true] %s1790
      %1793 = dma.vmem_to_hbm [thread:$0]  %s1791, 128, %s4, [#allocation9]
    $region29: #{tpu_custom_call.1} parent=1 // pred_fallthru
      _
    // Predicated region
    $region30: #{tpu_custom_call.1} parent=1 // pred_check
      _
    $region31: #{tpu_custom_call.1} parent=1 // pred_check_branch
      %1795 = sbr.rel (0) target = $region33
    $region32: #{tpu_custom_call.1} parent=1 // pred_region
      %1796 = dma.done [#allocation4], 1024
    $region33: #{tpu_custom_call.1} parent=1 // pred_fallthru
      _
    // Predicated region
    $region34: #{tpu_custom_call.1} parent=1 // pred_check
      _
    $region35: #{tpu_custom_call.1} parent=1 // pred_check_branch
      %1798 = sbr.rel (0) target = $region37
    $region36: #{tpu_custom_call.1} parent=1 // pred_region
      %1799 = dma.done [#allocation9], 128
    $region37: #{tpu_custom_call.1} parent=1 // pred_fallthru
      _
    %1800 = vsyncpa [#allocation3], 1
    %1801 = vsyncpa [#allocation6], 1
    %1802 = vsyncpa [#allocation4], 1
    %1803 = vsyncpa [#allocation9], 1

</llo_original>
